<compile_context>
chip_gen: v7x
topology: tpu7x:2x2x1
jax: 0.10.0
libtpu: 0.0.40
codegen_flags: <defaults>
</compile_context>

<pallas_src>
import functools

import jax
import jax.numpy as jnp
from jax import lax
from jax.experimental import pallas as pl
from jax.experimental.pallas import tpu as pltpu


# Optional MXU-operand dtype for the hoisted (non-recurrent) matmuls.
# Set to jnp.bfloat16 on v6e/v7x at production H/T (~2x MXU throughput); the
# carried hidden state, gate nonlinearities and the (1-z)*n + z*h update always
# stay f32 (f32 accumulation via preferred_element_type), so no error compounds
# over T.  Left None so the f32 test tolerance (1e-4 vs the reference) holds.
MXU_INPUT_DTYPE = None


def _mxu(a):
    return a if MXU_INPUT_DTYPE is None else a.astype(MXU_INPUT_DTYPE)


# --------------------------------------------------------------------------
# Fused decoder kernel: all GRU layers + output Linear, whole sequence,
# single grid step.
# --------------------------------------------------------------------------
def _decoder_kernel(*refs, depth):
    # refs = [x, h0, (w_i, w_h, b_i, b_nh) * depth, wp, bp, out, gi_s, y_s]
    x_ref, h0_ref = refs[0], refs[1]
    layer_refs = refs[2:2 + 4 * depth]
    wp_ref, bp_ref = refs[2 + 4 * depth], refs[3 + 4 * depth]
    out_ref = refs[4 + 4 * depth]
    gi_s, y_s = refs[5 + 4 * depth], refs[6 + 4 * depth]

    T, B, H = y_s.shape
    h0 = h0_ref[...].astype(jnp.float32)          # same h0 for every layer (rep.expand)

    x2 = x_ref[...]                               # (T*B, F_in), pre-flattened by wrapper
    for l in range(depth):
        w_i = layer_refs[4 * l + 0][...]          # (in, 3H), column order r|z|n
        w_h = layer_refs[4 * l + 1][...]          # (H, 3H)  fused recurrent weights
        b_i = layer_refs[4 * l + 2][...]          # (1, 3H) = [b_ir+b_hr | b_iz+b_hz | b_in]
        b_nh = jnp.broadcast_to(layer_refs[4 * l + 3][...], (B, H))   # b_hn (stays in r*(.))

        if l > 0:
            # Previous layer's hidden sequence (kept in VMEM) is this layer's input.
            x2 = y_s[...].reshape(T * B, H)

        # Hoisted input projection: ONE matmul for the whole sequence, all gates.
        gi_s[...] = (jnp.dot(_mxu(x2), _mxu(w_i), preferred_element_type=jnp.float32)
                     + b_i).reshape(T, B, 3 * H)

        # Serial recurrence: per step ONE fused (B,H)@(H,3H) dot, ONE fused sigmoid
        # over the r|z slab, one tanh; h carried as a loop value (no VMEM round trip).
        def step(t, h):
            gi = gi_s[t]                                               # (B, 3H) - 1 vld
            gh = jnp.dot(h, w_h, preferred_element_type=jnp.float32)   # (B, 3H) - 1 MXU dot
            rz = jax.nn.sigmoid(gi[:, :2 * H] + gh[:, :2 * H])         # r and z together
            r, z = rz[:, :H], rz[:, H:]
            n = jnp.tanh(gi[:, 2 * H:] + r * (gh[:, 2 * H:] + b_nh))
            h_new = (1.0 - z) * n + z * h
            y_s[t] = h_new                                             # 1 vst
            return h_new

        # TODO(synk): for long T, alias y into gi_s[:, :, 2H:3H] (gi_n is fully
        #             consumed before the write) to drop this scratch buffer.
        lax.fori_loop(0, T, step, h0, unroll=min(T, 8))

    # Fused output projection: one flattened matmul; hidden seq never leaves VMEM.
    y2 = y_s[...].reshape(T * B, H)
    out_ref[...] = (jnp.dot(_mxu(y2), _mxu(wp_ref[...]),
                            preferred_element_type=jnp.float32)
                    + bp_ref[...]).astype(out_ref.dtype)


def decoder_fused(x2, h0, layers, proj_wt, proj_b):
    """x2: (T*B, F_in) time-major flattened input; h0: (B, H).
    layers: list of per-layer dicts (see repack_params).
    Returns (T*B, F_out)."""
    TB, F_in = x2.shape
    B, H = h0.shape
    T = TB // B
    F_out = proj_wt.shape[-1]
    depth = len(layers)
    zero2 = lambda i: (0, 0)

    inputs = [x2, h0]
    in_specs = [pl.BlockSpec((TB, F_in), zero2),      # x (whole flattened sequence)
                pl.BlockSpec((B, H), zero2)]          # h0
    for layer in layers:
        inputs += [layer["w_i"], layer["w_h"], layer["b_i"], layer["b_nh"]]
        in_specs += [pl.BlockSpec(layer["w_i"].shape, zero2),   # W_i  (in, 3H)
                     pl.BlockSpec((H, 3 * H), zero2),           # W_h  (H, 3H)
                     pl.BlockSpec((1, 3 * H), zero2),           # fused input bias
                     pl.BlockSpec((1, H), zero2)]               # b_hn
    inputs += [proj_wt, proj_b]
    in_specs += [pl.BlockSpec((H, F_out), zero2),               # W_proj^T
                 pl.BlockSpec((1, F_out), zero2)]               # b_proj

    return pl.pallas_call(
        functools.partial(_decoder_kernel, depth=depth),
        out_shape=jax.ShapeDtypeStruct((TB, F_out), jnp.float32),
        grid_spec=pltpu.PrefetchScalarGridSpec(
            num_scalar_prefetch=0,
            grid=(1,),
            in_specs=in_specs,
            out_specs=pl.BlockSpec((TB, F_out), zero2),
            scratch_shapes=[pltpu.VMEM((T, B, 3 * H), jnp.float32),   # fused gi (r|z|n)
                            pltpu.VMEM((T, B, H), jnp.float32)],      # hidden sequence
        ),
        compiler_params=pltpu.CompilerParams(
            dimension_semantics=("arbitrary",)),
    )(*inputs)


# --------------------------------------------------------------------------
# Decoder forward (wrapper = layout glue only; all compute is in the kernel).
# --------------------------------------------------------------------------
@jax.jit
def decoder_forward(packed, rep, prev):
    """rep: (B, H), prev: (B, T, F).  Returns pred: (B, T, F)."""
    B, T, F = prev.shape
    x2 = jnp.transpose(prev, (1, 0, 2)).reshape(T * B, F).astype(jnp.float32)
    h0 = rep.astype(jnp.float32)
    out2 = decoder_fused(x2, h0, packed["layers"],
                         packed["proj_w_t"], packed["proj_b"])       # (T*B, F)
    return jnp.transpose(out2.reshape(T, B, F), (1, 0, 2))           # (B, T, F)


# --------------------------------------------------------------------------
# Parameter handling: torch-layout params -> kernel layout (fused per-layer
# (in, 3H)/(H, 3H) weights, biases pre-folded).  Gate order: r, z, n.
# --------------------------------------------------------------------------
def repack_params(params):
    packed = {"layers": []}
    for layer in params["gru"]:
        w_ih, w_hh = layer["w_ih"], layer["w_hh"]      # (3H, in), (3H, H)
        b_ih, b_hh = layer["b_ih"], layer["b_hh"]      # (3H,), (3H,)
        H = w_hh.shape[1]
        b_i = jnp.concatenate([b_ih[0 * H:1 * H] + b_hh[0 * H:1 * H],
                               b_ih[1 * H:2 * H] + b_hh[1 * H:2 * H],
                               b_ih[2 * H:3 * H]]).reshape(1, 3 * H)
        packed["layers"].append({
            "w_i": w_ih.T,                              # (in, 3H), columns r|z|n
            "w_h": w_hh.T,                              # (H, 3H),  columns r|z|n
            "b_i": b_i,                                 # (1, 3H)
            "b_nh": b_hh[2 * H:3 * H].reshape(1, H),    # (1, H)
        })
    packed["proj_w_t"] = params["proj_w"].T             # (H, F)
    packed["proj_b"] = params["proj_b"].reshape(1, -1)  # (1, F)
    return packed


def init_params(key, size_feature, size, depth):
    """Torch-shaped params for nn.GRU(size_feature, size, depth) + nn.Linear(size, size_feature)."""
    k = 1.0 / jnp.sqrt(size)
    params = {"gru": []}
    for layer in range(depth):
        in_dim = size_feature if layer == 0 else size
        key, k1, k2, k3, k4 = jax.random.split(key, 5)
        params["gru"].append({
            "w_ih": jax.random.uniform(k1, (3 * size, in_dim), jnp.float32, -k, k),
            "w_hh": jax.random.uniform(k2, (3 * size, size), jnp.float32, -k, k),
            "b_ih": jax.random.uniform(k3, (3 * size,), jnp.float32, -k, k),
            "b_hh": jax.random.uniform(k4, (3 * size,), jnp.float32, -k, k),
        })
    key, k5, k6 = jax.random.split(key, 3)
    params["proj_w"] = jax.random.uniform(k5, (size_feature, size), jnp.float32, -k, k)
    params["proj_b"] = jax.random.uniform(k6, (size_feature,), jnp.float32, -k, k)
    return params


# --------------------------------------------------------------------------
# Pure-JAX reference (torch.nn.GRU gate math on torch-layout weights) —
# independently validates both the repacking and the kernel.
# --------------------------------------------------------------------------
def decoder_reference(params, rep, prev):
    x = prev.astype(jnp.float32)                        # (B, T, F)
    for layer in params["gru"]:
        w_ih, w_hh = layer["w_ih"], layer["w_hh"]
        b_ih, b_hh = layer["b_ih"], layer["b_hh"]
        H = w_hh.shape[1]

        def step(h, x_t):
            gi = x_t @ w_ih.T + b_ih
            gh = h @ w_hh.T + b_hh
            r = jax.nn.sigmoid(gi[:, :H] + gh[:, :H])
            z = jax.nn.sigmoid(gi[:, H:2 * H] + gh[:, H:2 * H])
            n = jnp.tanh(gi[:, 2 * H:] + r * gh[:, 2 * H:])
            h_new = (1.0 - z) * n + z * h
            return h_new, h_new

        _, ys = lax.scan(step, rep.astype(jnp.float32), jnp.transpose(x, (1, 0, 2)))
        x = jnp.transpose(ys, (1, 0, 2))
    return x @ params["proj_w"].T + params["proj_b"]


if __name__ == "__main__":
    B, T = 2, 8
    SIZE_FEATURE, SIZE = 32, 32

    key = jax.random.PRNGKey(0)
    for depth in (1, 2):                                 # default depth=1, plus stacked-layer check
        key, kp, kr, kx = jax.random.split(key, 4)
        params = init_params(kp, SIZE_FEATURE, SIZE, depth)
        packed = repack_params(params)

        rep = jax.random.normal(kr, (B, SIZE), jnp.float32)              # hidden seed
        prev = jax.random.normal(kx, (B, T, SIZE_FEATURE), jnp.float32)  # teacher-forced input

        pred = jax.block_until_ready(decoder_forward(packed, rep, prev))
        ref = decoder_reference(params, rep, prev)

        assert pred.shape == (B, T, SIZE_FEATURE)
        err = jnp.max(jnp.abs(pred - ref))
        assert jnp.allclose(pred, ref, atol=1e-4, rtol=1e-4), \
            f"depth={depth}: max err {err}"

    print("KERNEL_OK")
</pallas_src>

<mosaic_0001>
module attributes {stable_mosaic.version = 11 : i64} {
  func.func @_decoder_kernel(%arg0: i32, %arg1: memref<16x32xf32, #tpu.memory_space<vmem>>, %arg2: memref<2x32xf32, #tpu.memory_space<vmem>>, %arg3: memref<32x96xf32, #tpu.memory_space<vmem>>, %arg4: memref<32x96xf32, #tpu.memory_space<vmem>>, %arg5: memref<1x96xf32, #tpu.memory_space<vmem>>, %arg6: memref<1x32xf32, #tpu.memory_space<vmem>>, %arg7: memref<32x32xf32, #tpu.memory_space<vmem>>, %arg8: memref<1x32xf32, #tpu.memory_space<vmem>>, %arg9: memref<16x32xf32, #tpu.memory_space<vmem>>, %arg10: memref<8x2x96xf32, #tpu.memory_space<vmem>>, %arg11: memref<8x2x32xf32, #tpu.memory_space<vmem>>) attributes {dimension_semantics = [#tpu.dimension_semantics<arbitrary>], iteration_bounds = array<i64: 1>, scalar_prefetch = 0 : i64, scratch_operands = 2 : i64, tpu.core_type = #tpu.core_type<tc>, window_params = [{pipeline_mode = #tpu.pipeline_mode<synchronous>, transform_indices = @transform_0, window_bounds = array<i64: 16, 32>}, {pipeline_mode = #tpu.pipeline_mode<synchronous>, transform_indices = @transform_1, window_bounds = array<i64: 2, 32>}, {pipeline_mode = #tpu.pipeline_mode<synchronous>, transform_indices = @transform_2, window_bounds = array<i64: 32, 96>}, {pipeline_mode = #tpu.pipeline_mode<synchronous>, transform_indices = @transform_3, window_bounds = array<i64: 32, 96>}, {pipeline_mode = #tpu.pipeline_mode<synchronous>, transform_indices = @transform_4, window_bounds = array<i64: 1, 96>}, {pipeline_mode = #tpu.pipeline_mode<synchronous>, transform_indices = @transform_5, window_bounds = array<i64: 1, 32>}, {pipeline_mode = #tpu.pipeline_mode<synchronous>, transform_indices = @transform_6, window_bounds = array<i64: 32, 32>}, {pipeline_mode = #tpu.pipeline_mode<synchronous>, transform_indices = @transform_7, window_bounds = array<i64: 1, 32>}, {pipeline_mode = #tpu.pipeline_mode<synchronous>, transform_indices = @transform_8, window_bounds = array<i64: 16, 32>}]} {
    %c0 = arith.constant 0 : index
    %c0_0 = arith.constant 0 : index
    %0 = vector.load %arg2[%c0, %c0_0] : memref<2x32xf32, #tpu.memory_space<vmem>>, vector<2x32xf32>
    %c0_1 = arith.constant 0 : index
    %c0_2 = arith.constant 0 : index
    %1 = vector.load %arg1[%c0_1, %c0_2] : memref<16x32xf32, #tpu.memory_space<vmem>>, vector<16x32xf32>
    %c0_3 = arith.constant 0 : index
    %c0_4 = arith.constant 0 : index
    %2 = vector.load %arg3[%c0_3, %c0_4] : memref<32x96xf32, #tpu.memory_space<vmem>>, vector<32x96xf32>
    %c0_5 = arith.constant 0 : index
    %c0_6 = arith.constant 0 : index
    %3 = vector.load %arg4[%c0_5, %c0_6] : memref<32x96xf32, #tpu.memory_space<vmem>>, vector<32x96xf32>
    %c0_7 = arith.constant 0 : index
    %c0_8 = arith.constant 0 : index
    %4 = vector.load %arg5[%c0_7, %c0_8] : memref<1x96xf32, #tpu.memory_space<vmem>>, vector<1x96xf32>
    %c0_9 = arith.constant 0 : index
    %c0_10 = arith.constant 0 : index
    %5 = vector.load %arg6[%c0_9, %c0_10] : memref<1x32xf32, #tpu.memory_space<vmem>>, vector<1x32xf32>
    %6 = vector.shape_cast %5 : vector<1x32xf32> to vector<1x32xf32>
    %7 = vector.broadcast %6 : vector<1x32xf32> to vector<2x32xf32>
    %cst = arith.constant dense<0.000000e+00> : vector<16x96xf32>
    %8 = tpu.matmul %1, %2, %cst {dimension_numbers = #tpu.dot_dimension_numbers<[1], [0], [0], [1], [0, 0, 1, 1], [], []>} : vector<16x32xf32>, vector<32x96xf32>, vector<16x96xf32> -> vector<16x96xf32>
    %9 = vector.broadcast %4 : vector<1x96xf32> to vector<16x96xf32>
    %10 = arith.addf %8, %9 : vector<16x96xf32>
    %11 = vector.shape_cast %10 : vector<16x96xf32> to vector<8x2x96xf32>
    %c0_11 = arith.constant 0 : index
    %c0_12 = arith.constant 0 : index
    %c0_13 = arith.constant 0 : index
    %12 = vector.load %arg10[%c0_11, %c0_12, %c0_13] : memref<8x2x96xf32, #tpu.memory_space<vmem>>, vector<8x2x96xf32>
    tpu.vector_store %arg10[%c0_11, %c0_12, %c0_13], %11 {strides = array<i32>} : memref<8x2x96xf32, #tpu.memory_space<vmem>>, vector<8x2x96xf32>,
    %c0_i32 = arith.constant 0 : i32
    %13 = arith.index_cast %c0_i32 : i32 to index
    %c0_14 = arith.constant 0 : index
    %c0_15 = arith.constant 0 : index
    %14 = vector.load %arg10[%13, %c0_14, %c0_15] : memref<8x2x96xf32, #tpu.memory_space<vmem>>, vector<1x2x96xf32>
    %15 = vector.shape_cast %14 : vector<1x2x96xf32> to vector<2x96xf32>
    %cst_16 = arith.constant dense<0.000000e+00> : vector<2x96xf32>
    %16 = tpu.matmul %0, %3, %cst_16 {dimension_numbers = #tpu.dot_dimension_numbers<[1], [0], [0], [1], [0, 0, 1, 1], [], []>} : vector<2x32xf32>, vector<32x96xf32>, vector<2x96xf32> -> vector<2x96xf32>
    %17 = vector.extract_strided_slice %15 {offsets = [0, 0], sizes = [2, 64], strides = [1, 1]} : vector<2x96xf32> to vector<2x64xf32>
    %18 = vector.extract_strided_slice %16 {offsets = [0, 0], sizes = [2, 64], strides = [1, 1]} : vector<2x96xf32> to vector<2x64xf32>
    %19 = arith.addf %17, %18 : vector<2x64xf32>
    %20 = arith.negf %19 : vector<2x64xf32>
    %21 = math.exp %20 : vector<2x64xf32>
    %cst_17 = arith.constant 1.000000e+00 : f32
    %22 = vector.broadcast %cst_17 : f32 to vector<2x64xf32>
    %23 = arith.addf %22, %21 : vector<2x64xf32>
    %24 = arith.divf %22, %23 : vector<2x64xf32>
    %25 = vector.extract_strided_slice %24 {offsets = [0, 0], sizes = [2, 32], strides = [1, 1]} : vector<2x64xf32> to vector<2x32xf32>
    %26 = vector.extract_strided_slice %24 {offsets = [0, 32], sizes = [2, 32], strides = [1, 1]} : vector<2x64xf32> to vector<2x32xf32>
    %27 = vector.extract_strided_slice %15 {offsets = [0, 64], sizes = [2, 32], strides = [1, 1]} : vector<2x96xf32> to vector<2x32xf32>
    %28 = vector.extract_strided_slice %16 {offsets = [0, 64], sizes = [2, 32], strides = [1, 1]} : vector<2x96xf32> to vector<2x32xf32>
    %29 = arith.addf %28, %7 : vector<2x32xf32>
    %30 = arith.mulf %25, %29 : vector<2x32xf32>
    %31 = arith.addf %27, %30 : vector<2x32xf32>
    %32 = math.tanh %31 : vector<2x32xf32>
    %cst_18 = arith.constant 1.000000e+00 : f32
    %33 = vector.broadcast %cst_18 : f32 to vector<2x32xf32>
    %34 = arith.subf %33, %26 : vector<2x32xf32>
    %35 = arith.mulf %34, %32 : vector<2x32xf32>
    %36 = arith.mulf %26, %0 : vector<2x32xf32>
    %37 = arith.addf %35, %36 : vector<2x32xf32>
    %38 = arith.index_cast %c0_i32 : i32 to index
    %c0_19 = arith.constant 0 : index
    %c0_20 = arith.constant 0 : index
    %39 = vector.load %arg11[%38, %c0_19, %c0_20] : memref<8x2x32xf32, #tpu.memory_space<vmem>>, vector<1x2x32xf32>
    %40 = vector.shape_cast %39 : vector<1x2x32xf32> to vector<2x32xf32>
    %41 = vector.shape_cast %37 : vector<2x32xf32> to vector<1x2x32xf32>
    tpu.vector_store %arg11[%38, %c0_19, %c0_20], %41 {strides = array<i32>} : memref<8x2x32xf32, #tpu.memory_space<vmem>>, vector<1x2x32xf32>,
    %c1_i32 = arith.constant 1 : i32
    %42 = arith.index_cast %c1_i32 : i32 to index
    %c0_21 = arith.constant 0 : index
    %c0_22 = arith.constant 0 : index
    %43 = vector.load %arg10[%42, %c0_21, %c0_22] : memref<8x2x96xf32, #tpu.memory_space<vmem>>, vector<1x2x96xf32>
    %44 = vector.shape_cast %43 : vector<1x2x96xf32> to vector<2x96xf32>
    %cst_23 = arith.constant dense<0.000000e+00> : vector<2x96xf32>
    %45 = tpu.matmul %37, %3, %cst_23 {dimension_numbers = #tpu.dot_dimension_numbers<[1], [0], [0], [1], [0, 0, 1, 1], [], []>} : vector<2x32xf32>, vector<32x96xf32>, vector<2x96xf32> -> vector<2x96xf32>
    %46 = vector.extract_strided_slice %44 {offsets = [0, 0], sizes = [2, 64], strides = [1, 1]} : vector<2x96xf32> to vector<2x64xf32>
    %47 = vector.extract_strided_slice %45 {offsets = [0, 0], sizes = [2, 64], strides = [1, 1]} : vector<2x96xf32> to vector<2x64xf32>
    %48 = arith.addf %46, %47 : vector<2x64xf32>
    %49 = arith.negf %48 : vector<2x64xf32>
    %50 = math.exp %49 : vector<2x64xf32>
    %cst_24 = arith.constant 1.000000e+00 : f32
    %51 = vector.broadcast %cst_24 : f32 to vector<2x64xf32>
    %52 = arith.addf %51, %50 : vector<2x64xf32>
    %53 = arith.divf %51, %52 : vector<2x64xf32>
    %54 = vector.extract_strided_slice %53 {offsets = [0, 0], sizes = [2, 32], strides = [1, 1]} : vector<2x64xf32> to vector<2x32xf32>
    %55 = vector.extract_strided_slice %53 {offsets = [0, 32], sizes = [2, 32], strides = [1, 1]} : vector<2x64xf32> to vector<2x32xf32>
    %56 = vector.extract_strided_slice %44 {offsets = [0, 64], sizes = [2, 32], strides = [1, 1]} : vector<2x96xf32> to vector<2x32xf32>
    %57 = vector.extract_strided_slice %45 {offsets = [0, 64], sizes = [2, 32], strides = [1, 1]} : vector<2x96xf32> to vector<2x32xf32>
    %58 = arith.addf %57, %7 : vector<2x32xf32>
    %59 = arith.mulf %54, %58 : vector<2x32xf32>
    %60 = arith.addf %56, %59 : vector<2x32xf32>
    %61 = math.tanh %60 : vector<2x32xf32>
    %cst_25 = arith.constant 1.000000e+00 : f32
    %62 = vector.broadcast %cst_25 : f32 to vector<2x32xf32>
    %63 = arith.subf %62, %55 : vector<2x32xf32>
    %64 = arith.mulf %63, %61 : vector<2x32xf32>
    %65 = arith.mulf %55, %37 : vector<2x32xf32>
    %66 = arith.addf %64, %65 : vector<2x32xf32>
    %67 = arith.index_cast %c1_i32 : i32 to index
    %c0_26 = arith.constant 0 : index
    %c0_27 = arith.constant 0 : index
    %68 = vector.load %arg11[%67, %c0_26, %c0_27] : memref<8x2x32xf32, #tpu.memory_space<vmem>>, vector<1x2x32xf32>
    %69 = vector.shape_cast %68 : vector<1x2x32xf32> to vector<2x32xf32>
    %70 = vector.shape_cast %66 : vector<2x32xf32> to vector<1x2x32xf32>
    tpu.vector_store %arg11[%67, %c0_26, %c0_27], %70 {strides = array<i32>} : memref<8x2x32xf32, #tpu.memory_space<vmem>>, vector<1x2x32xf32>,
    %c2_i32 = arith.constant 2 : i32
    %71 = arith.index_cast %c2_i32 : i32 to index
    %c0_28 = arith.constant 0 : index
    %c0_29 = arith.constant 0 : index
    %72 = vector.load %arg10[%71, %c0_28, %c0_29] : memref<8x2x96xf32, #tpu.memory_space<vmem>>, vector<1x2x96xf32>
    %73 = vector.shape_cast %72 : vector<1x2x96xf32> to vector<2x96xf32>
    %cst_30 = arith.constant dense<0.000000e+00> : vector<2x96xf32>
    %74 = tpu.matmul %66, %3, %cst_30 {dimension_numbers = #tpu.dot_dimension_numbers<[1], [0], [0], [1], [0, 0, 1, 1], [], []>} : vector<2x32xf32>, vector<32x96xf32>, vector<2x96xf32> -> vector<2x96xf32>
    %75 = vector.extract_strided_slice %73 {offsets = [0, 0], sizes = [2, 64], strides = [1, 1]} : vector<2x96xf32> to vector<2x64xf32>
    %76 = vector.extract_strided_slice %74 {offsets = [0, 0], sizes = [2, 64], strides = [1, 1]} : vector<2x96xf32> to vector<2x64xf32>
    %77 = arith.addf %75, %76 : vector<2x64xf32>
    %78 = arith.negf %77 : vector<2x64xf32>
    %79 = math.exp %78 : vector<2x64xf32>
    %cst_31 = arith.constant 1.000000e+00 : f32
    %80 = vector.broadcast %cst_31 : f32 to vector<2x64xf32>
    %81 = arith.addf %80, %79 : vector<2x64xf32>
    %82 = arith.divf %80, %81 : vector<2x64xf32>
    %83 = vector.extract_strided_slice %82 {offsets = [0, 0], sizes = [2, 32], strides = [1, 1]} : vector<2x64xf32> to vector<2x32xf32>
    %84 = vector.extract_strided_slice %82 {offsets = [0, 32], sizes = [2, 32], strides = [1, 1]} : vector<2x64xf32> to vector<2x32xf32>
    %85 = vector.extract_strided_slice %73 {offsets = [0, 64], sizes = [2, 32], strides = [1, 1]} : vector<2x96xf32> to vector<2x32xf32>
    %86 = vector.extract_strided_slice %74 {offsets = [0, 64], sizes = [2, 32], strides = [1, 1]} : vector<2x96xf32> to vector<2x32xf32>
    %87 = arith.addf %86, %7 : vector<2x32xf32>
    %88 = arith.mulf %83, %87 : vector<2x32xf32>
    %89 = arith.addf %85, %88 : vector<2x32xf32>
    %90 = math.tanh %89 : vector<2x32xf32>
    %cst_32 = arith.constant 1.000000e+00 : f32
    %91 = vector.broadcast %cst_32 : f32 to vector<2x32xf32>
    %92 = arith.subf %91, %84 : vector<2x32xf32>
    %93 = arith.mulf %92, %90 : vector<2x32xf32>
    %94 = arith.mulf %84, %66 : vector<2x32xf32>
    %95 = arith.addf %93, %94 : vector<2x32xf32>
    %96 = arith.index_cast %c2_i32 : i32 to index
    %c0_33 = arith.constant 0 : index
    %c0_34 = arith.constant 0 : index
    %97 = vector.load %arg11[%96, %c0_33, %c0_34] : memref<8x2x32xf32, #tpu.memory_space<vmem>>, vector<1x2x32xf32>
    %98 = vector.shape_cast %97 : vector<1x2x32xf32> to vector<2x32xf32>
    %99 = vector.shape_cast %95 : vector<2x32xf32> to vector<1x2x32xf32>
    tpu.vector_store %arg11[%96, %c0_33, %c0_34], %99 {strides = array<i32>} : memref<8x2x32xf32, #tpu.memory_space<vmem>>, vector<1x2x32xf32>,
    %c3_i32 = arith.constant 3 : i32
    %100 = arith.index_cast %c3_i32 : i32 to index
    %c0_35 = arith.constant 0 : index
    %c0_36 = arith.constant 0 : index
    %101 = vector.load %arg10[%100, %c0_35, %c0_36] : memref<8x2x96xf32, #tpu.memory_space<vmem>>, vector<1x2x96xf32>
    %102 = vector.shape_cast %101 : vector<1x2x96xf32> to vector<2x96xf32>
    %cst_37 = arith.constant dense<0.000000e+00> : vector<2x96xf32>
    %103 = tpu.matmul %95, %3, %cst_37 {dimension_numbers = #tpu.dot_dimension_numbers<[1], [0], [0], [1], [0, 0, 1, 1], [], []>} : vector<2x32xf32>, vector<32x96xf32>, vector<2x96xf32> -> vector<2x96xf32>
    %104 = vector.extract_strided_slice %102 {offsets = [0, 0], sizes = [2, 64], strides = [1, 1]} : vector<2x96xf32> to vector<2x64xf32>
    %105 = vector.extract_strided_slice %103 {offsets = [0, 0], sizes = [2, 64], strides = [1, 1]} : vector<2x96xf32> to vector<2x64xf32>
    %106 = arith.addf %104, %105 : vector<2x64xf32>
    %107 = arith.negf %106 : vector<2x64xf32>
    %108 = math.exp %107 : vector<2x64xf32>
    %cst_38 = arith.constant 1.000000e+00 : f32
    %109 = vector.broadcast %cst_38 : f32 to vector<2x64xf32>
    %110 = arith.addf %109, %108 : vector<2x64xf32>
    %111 = arith.divf %109, %110 : vector<2x64xf32>
    %112 = vector.extract_strided_slice %111 {offsets = [0, 0], sizes = [2, 32], strides = [1, 1]} : vector<2x64xf32> to vector<2x32xf32>
    %113 = vector.extract_strided_slice %111 {offsets = [0, 32], sizes = [2, 32], strides = [1, 1]} : vector<2x64xf32> to vector<2x32xf32>
    %114 = vector.extract_strided_slice %102 {offsets = [0, 64], sizes = [2, 32], strides = [1, 1]} : vector<2x96xf32> to vector<2x32xf32>
    %115 = vector.extract_strided_slice %103 {offsets = [0, 64], sizes = [2, 32], strides = [1, 1]} : vector<2x96xf32> to vector<2x32xf32>
    %116 = arith.addf %115, %7 : vector<2x32xf32>
    %117 = arith.mulf %112, %116 : vector<2x32xf32>
    %118 = arith.addf %114, %117 : vector<2x32xf32>
    %119 = math.tanh %118 : vector<2x32xf32>
    %cst_39 = arith.constant 1.000000e+00 : f32
    %120 = vector.broadcast %cst_39 : f32 to vector<2x32xf32>
    %121 = arith.subf %120, %113 : vector<2x32xf32>
    %122 = arith.mulf %121, %119 : vector<2x32xf32>
    %123 = arith.mulf %113, %95 : vector<2x32xf32>
    %124 = arith.addf %122, %123 : vector<2x32xf32>
    %125 = arith.index_cast %c3_i32 : i32 to index
    %c0_40 = arith.constant 0 : index
    %c0_41 = arith.constant 0 : index
    %126 = vector.load %arg11[%125, %c0_40, %c0_41] : memref<8x2x32xf32, #tpu.memory_space<vmem>>, vector<1x2x32xf32>
    %127 = vector.shape_cast %126 : vector<1x2x32xf32> to vector<2x32xf32>
    %128 = vector.shape_cast %124 : vector<2x32xf32> to vector<1x2x32xf32>
    tpu.vector_store %arg11[%125, %c0_40, %c0_41], %128 {strides = array<i32>} : memref<8x2x32xf32, #tpu.memory_space<vmem>>, vector<1x2x32xf32>,
    %c4_i32 = arith.constant 4 : i32
    %129 = arith.index_cast %c4_i32 : i32 to index
    %c0_42 = arith.constant 0 : index
    %c0_43 = arith.constant 0 : index
    %130 = vector.load %arg10[%129, %c0_42, %c0_43] : memref<8x2x96xf32, #tpu.memory_space<vmem>>, vector<1x2x96xf32>
    %131 = vector.shape_cast %130 : vector<1x2x96xf32> to vector<2x96xf32>
    %cst_44 = arith.constant dense<0.000000e+00> : vector<2x96xf32>
    %132 = tpu.matmul %124, %3, %cst_44 {dimension_numbers = #tpu.dot_dimension_numbers<[1], [0], [0], [1], [0, 0, 1, 1], [], []>} : vector<2x32xf32>, vector<32x96xf32>, vector<2x96xf32> -> vector<2x96xf32>
    %133 = vector.extract_strided_slice %131 {offsets = [0, 0], sizes = [2, 64], strides = [1, 1]} : vector<2x96xf32> to vector<2x64xf32>
    %134 = vector.extract_strided_slice %132 {offsets = [0, 0], sizes = [2, 64], strides = [1, 1]} : vector<2x96xf32> to vector<2x64xf32>
    %135 = arith.addf %133, %134 : vector<2x64xf32>
    %136 = arith.negf %135 : vector<2x64xf32>
    %137 = math.exp %136 : vector<2x64xf32>
    %cst_45 = arith.constant 1.000000e+00 : f32
    %138 = vector.broadcast %cst_45 : f32 to vector<2x64xf32>
    %139 = arith.addf %138, %137 : vector<2x64xf32>
    %140 = arith.divf %138, %139 : vector<2x64xf32>
    %141 = vector.extract_strided_slice %140 {offsets = [0, 0], sizes = [2, 32], strides = [1, 1]} : vector<2x64xf32> to vector<2x32xf32>
    %142 = vector.extract_strided_slice %140 {offsets = [0, 32], sizes = [2, 32], strides = [1, 1]} : vector<2x64xf32> to vector<2x32xf32>
    %143 = vector.extract_strided_slice %131 {offsets = [0, 64], sizes = [2, 32], strides = [1, 1]} : vector<2x96xf32> to vector<2x32xf32>
    %144 = vector.extract_strided_slice %132 {offsets = [0, 64], sizes = [2, 32], strides = [1, 1]} : vector<2x96xf32> to vector<2x32xf32>
    %145 = arith.addf %144, %7 : vector<2x32xf32>
    %146 = arith.mulf %141, %145 : vector<2x32xf32>
    %147 = arith.addf %143, %146 : vector<2x32xf32>
    %148 = math.tanh %147 : vector<2x32xf32>
    %cst_46 = arith.constant 1.000000e+00 : f32
    %149 = vector.broadcast %cst_46 : f32 to vector<2x32xf32>
    %150 = arith.subf %149, %142 : vector<2x32xf32>
    %151 = arith.mulf %150, %148 : vector<2x32xf32>
    %152 = arith.mulf %142, %124 : vector<2x32xf32>
    %153 = arith.addf %151, %152 : vector<2x32xf32>
    %154 = arith.index_cast %c4_i32 : i32 to index
    %c0_47 = arith.constant 0 : index
    %c0_48 = arith.constant 0 : index
    %155 = vector.load %arg11[%154, %c0_47, %c0_48] : memref<8x2x32xf32, #tpu.memory_space<vmem>>, vector<1x2x32xf32>
    %156 = vector.shape_cast %155 : vector<1x2x32xf32> to vector<2x32xf32>
    %157 = vector.shape_cast %153 : vector<2x32xf32> to vector<1x2x32xf32>
    tpu.vector_store %arg11[%154, %c0_47, %c0_48], %157 {strides = array<i32>} : memref<8x2x32xf32, #tpu.memory_space<vmem>>, vector<1x2x32xf32>,
    %c5_i32 = arith.constant 5 : i32
    %158 = arith.index_cast %c5_i32 : i32 to index
    %c0_49 = arith.constant 0 : index
    %c0_50 = arith.constant 0 : index
    %159 = vector.load %arg10[%158, %c0_49, %c0_50] : memref<8x2x96xf32, #tpu.memory_space<vmem>>, vector<1x2x96xf32>
    %160 = vector.shape_cast %159 : vector<1x2x96xf32> to vector<2x96xf32>
    %cst_51 = arith.constant dense<0.000000e+00> : vector<2x96xf32>
    %161 = tpu.matmul %153, %3, %cst_51 {dimension_numbers = #tpu.dot_dimension_numbers<[1], [0], [0], [1], [0, 0, 1, 1], [], []>} : vector<2x32xf32>, vector<32x96xf32>, vector<2x96xf32> -> vector<2x96xf32>
    %162 = vector.extract_strided_slice %160 {offsets = [0, 0], sizes = [2, 64], strides = [1, 1]} : vector<2x96xf32> to vector<2x64xf32>
    %163 = vector.extract_strided_slice %161 {offsets = [0, 0], sizes = [2, 64], strides = [1, 1]} : vector<2x96xf32> to vector<2x64xf32>
    %164 = arith.addf %162, %163 : vector<2x64xf32>
    %165 = arith.negf %164 : vector<2x64xf32>
    %166 = math.exp %165 : vector<2x64xf32>
    %cst_52 = arith.constant 1.000000e+00 : f32
    %167 = vector.broadcast %cst_52 : f32 to vector<2x64xf32>
    %168 = arith.addf %167, %166 : vector<2x64xf32>
    %169 = arith.divf %167, %168 : vector<2x64xf32>
    %170 = vector.extract_strided_slice %169 {offsets = [0, 0], sizes = [2, 32], strides = [1, 1]} : vector<2x64xf32> to vector<2x32xf32>
    %171 = vector.extract_strided_slice %169 {offsets = [0, 32], sizes = [2, 32], strides = [1, 1]} : vector<2x64xf32> to vector<2x32xf32>
    %172 = vector.extract_strided_slice %160 {offsets = [0, 64], sizes = [2, 32], strides = [1, 1]} : vector<2x96xf32> to vector<2x32xf32>
    %173 = vector.extract_strided_slice %161 {offsets = [0, 64], sizes = [2, 32], strides = [1, 1]} : vector<2x96xf32> to vector<2x32xf32>
    %174 = arith.addf %173, %7 : vector<2x32xf32>
    %175 = arith.mulf %170, %174 : vector<2x32xf32>
    %176 = arith.addf %172, %175 : vector<2x32xf32>
    %177 = math.tanh %176 : vector<2x32xf32>
    %cst_53 = arith.constant 1.000000e+00 : f32
    %178 = vector.broadcast %cst_53 : f32 to vector<2x32xf32>
    %179 = arith.subf %178, %171 : vector<2x32xf32>
    %180 = arith.mulf %179, %177 : vector<2x32xf32>
    %181 = arith.mulf %171, %153 : vector<2x32xf32>
    %182 = arith.addf %180, %181 : vector<2x32xf32>
    %183 = arith.index_cast %c5_i32 : i32 to index
    %c0_54 = arith.constant 0 : index
    %c0_55 = arith.constant 0 : index
    %184 = vector.load %arg11[%183, %c0_54, %c0_55] : memref<8x2x32xf32, #tpu.memory_space<vmem>>, vector<1x2x32xf32>
    %185 = vector.shape_cast %184 : vector<1x2x32xf32> to vector<2x32xf32>
    %186 = vector.shape_cast %182 : vector<2x32xf32> to vector<1x2x32xf32>
    tpu.vector_store %arg11[%183, %c0_54, %c0_55], %186 {strides = array<i32>} : memref<8x2x32xf32, #tpu.memory_space<vmem>>, vector<1x2x32xf32>,
    %c6_i32 = arith.constant 6 : i32
    %187 = arith.index_cast %c6_i32 : i32 to index
    %c0_56 = arith.constant 0 : index
    %c0_57 = arith.constant 0 : index
    %188 = vector.load %arg10[%187, %c0_56, %c0_57] : memref<8x2x96xf32, #tpu.memory_space<vmem>>, vector<1x2x96xf32>
    %189 = vector.shape_cast %188 : vector<1x2x96xf32> to vector<2x96xf32>
    %cst_58 = arith.constant dense<0.000000e+00> : vector<2x96xf32>
    %190 = tpu.matmul %182, %3, %cst_58 {dimension_numbers = #tpu.dot_dimension_numbers<[1], [0], [0], [1], [0, 0, 1, 1], [], []>} : vector<2x32xf32>, vector<32x96xf32>, vector<2x96xf32> -> vector<2x96xf32>
    %191 = vector.extract_strided_slice %189 {offsets = [0, 0], sizes = [2, 64], strides = [1, 1]} : vector<2x96xf32> to vector<2x64xf32>
    %192 = vector.extract_strided_slice %190 {offsets = [0, 0], sizes = [2, 64], strides = [1, 1]} : vector<2x96xf32> to vector<2x64xf32>
    %193 = arith.addf %191, %192 : vector<2x64xf32>
    %194 = arith.negf %193 : vector<2x64xf32>
    %195 = math.exp %194 : vector<2x64xf32>
    %cst_59 = arith.constant 1.000000e+00 : f32
    %196 = vector.broadcast %cst_59 : f32 to vector<2x64xf32>
    %197 = arith.addf %196, %195 : vector<2x64xf32>
    %198 = arith.divf %196, %197 : vector<2x64xf32>
    %199 = vector.extract_strided_slice %198 {offsets = [0, 0], sizes = [2, 32], strides = [1, 1]} : vector<2x64xf32> to vector<2x32xf32>
    %200 = vector.extract_strided_slice %198 {offsets = [0, 32], sizes = [2, 32], strides = [1, 1]} : vector<2x64xf32> to vector<2x32xf32>
    %201 = vector.extract_strided_slice %189 {offsets = [0, 64], sizes = [2, 32], strides = [1, 1]} : vector<2x96xf32> to vector<2x32xf32>
    %202 = vector.extract_strided_slice %190 {offsets = [0, 64], sizes = [2, 32], strides = [1, 1]} : vector<2x96xf32> to vector<2x32xf32>
    %203 = arith.addf %202, %7 : vector<2x32xf32>
    %204 = arith.mulf %199, %203 : vector<2x32xf32>
    %205 = arith.addf %201, %204 : vector<2x32xf32>
    %206 = math.tanh %205 : vector<2x32xf32>
    %cst_60 = arith.constant 1.000000e+00 : f32
    %207 = vector.broadcast %cst_60 : f32 to vector<2x32xf32>
    %208 = arith.subf %207, %200 : vector<2x32xf32>
    %209 = arith.mulf %208, %206 : vector<2x32xf32>
    %210 = arith.mulf %200, %182 : vector<2x32xf32>
    %211 = arith.addf %209, %210 : vector<2x32xf32>
    %212 = arith.index_cast %c6_i32 : i32 to index
    %c0_61 = arith.constant 0 : index
    %c0_62 = arith.constant 0 : index
    %213 = vector.load %arg11[%212, %c0_61, %c0_62] : memref<8x2x32xf32, #tpu.memory_space<vmem>>, vector<1x2x32xf32>
    %214 = vector.shape_cast %213 : vector<1x2x32xf32> to vector<2x32xf32>
    %215 = vector.shape_cast %211 : vector<2x32xf32> to vector<1x2x32xf32>
    tpu.vector_store %arg11[%212, %c0_61, %c0_62], %215 {strides = array<i32>} : memref<8x2x32xf32, #tpu.memory_space<vmem>>, vector<1x2x32xf32>,
    %c7_i32 = arith.constant 7 : i32
    %216 = arith.index_cast %c7_i32 : i32 to index
    %c0_63 = arith.constant 0 : index
    %c0_64 = arith.constant 0 : index
    %217 = vector.load %arg10[%216, %c0_63, %c0_64] : memref<8x2x96xf32, #tpu.memory_space<vmem>>, vector<1x2x96xf32>
    %218 = vector.shape_cast %217 : vector<1x2x96xf32> to vector<2x96xf32>
    %cst_65 = arith.constant dense<0.000000e+00> : vector<2x96xf32>
    %219 = tpu.matmul %211, %3, %cst_65 {dimension_numbers = #tpu.dot_dimension_numbers<[1], [0], [0], [1], [0, 0, 1, 1], [], []>} : vector<2x32xf32>, vector<32x96xf32>, vector<2x96xf32> -> vector<2x96xf32>
    %220 = vector.extract_strided_slice %218 {offsets = [0, 0], sizes = [2, 64], strides = [1, 1]} : vector<2x96xf32> to vector<2x64xf32>
    %221 = vector.extract_strided_slice %219 {offsets = [0, 0], sizes = [2, 64], strides = [1, 1]} : vector<2x96xf32> to vector<2x64xf32>
    %222 = arith.addf %220, %221 : vector<2x64xf32>
    %223 = arith.negf %222 : vector<2x64xf32>
    %224 = math.exp %223 : vector<2x64xf32>
    %cst_66 = arith.constant 1.000000e+00 : f32
    %225 = vector.broadcast %cst_66 : f32 to vector<2x64xf32>
    %226 = arith.addf %225, %224 : vector<2x64xf32>
    %227 = arith.divf %225, %226 : vector<2x64xf32>
    %228 = vector.extract_strided_slice %227 {offsets = [0, 0], sizes = [2, 32], strides = [1, 1]} : vector<2x64xf32> to vector<2x32xf32>
    %229 = vector.extract_strided_slice %227 {offsets = [0, 32], sizes = [2, 32], strides = [1, 1]} : vector<2x64xf32> to vector<2x32xf32>
    %230 = vector.extract_strided_slice %218 {offsets = [0, 64], sizes = [2, 32], strides = [1, 1]} : vector<2x96xf32> to vector<2x32xf32>
    %231 = vector.extract_strided_slice %219 {offsets = [0, 64], sizes = [2, 32], strides = [1, 1]} : vector<2x96xf32> to vector<2x32xf32>
    %232 = arith.addf %231, %7 : vector<2x32xf32>
    %233 = arith.mulf %228, %232 : vector<2x32xf32>
    %234 = arith.addf %230, %233 : vector<2x32xf32>
    %235 = math.tanh %234 : vector<2x32xf32>
    %cst_67 = arith.constant 1.000000e+00 : f32
    %236 = vector.broadcast %cst_67 : f32 to vector<2x32xf32>
    %237 = arith.subf %236, %229 : vector<2x32xf32>
    %238 = arith.mulf %237, %235 : vector<2x32xf32>
    %239 = arith.mulf %229, %211 : vector<2x32xf32>
    %240 = arith.addf %238, %239 : vector<2x32xf32>
    %241 = arith.index_cast %c7_i32 : i32 to index
    %c0_68 = arith.constant 0 : index
    %c0_69 = arith.constant 0 : index
    %242 = vector.load %arg11[%241, %c0_68, %c0_69] : memref<8x2x32xf32, #tpu.memory_space<vmem>>, vector<1x2x32xf32>
    %243 = vector.shape_cast %242 : vector<1x2x32xf32> to vector<2x32xf32>
    %244 = vector.shape_cast %240 : vector<2x32xf32> to vector<1x2x32xf32>
    tpu.vector_store %arg11[%241, %c0_68, %c0_69], %244 {strides = array<i32>} : memref<8x2x32xf32, #tpu.memory_space<vmem>>, vector<1x2x32xf32>,
    %c8_i32 = arith.constant 8 : i32
    %c0_70 = arith.constant 0 : index
    %c0_71 = arith.constant 0 : index
    %c0_72 = arith.constant 0 : index
    %245 = vector.load %arg11[%c0_70, %c0_71, %c0_72] : memref<8x2x32xf32, #tpu.memory_space<vmem>>, vector<8x2x32xf32>
    %246 = vector.shape_cast %245 : vector<8x2x32xf32> to vector<16x32xf32>
    %c0_73 = arith.constant 0 : index
    %c0_74 = arith.constant 0 : index
    %247 = vector.load %arg7[%c0_73, %c0_74] : memref<32x32xf32, #tpu.memory_space<vmem>>, vector<32x32xf32>
    %cst_75 = arith.constant dense<0.000000e+00> : vector<16x32xf32>
    %248 = tpu.matmul %246, %247, %cst_75 {dimension_numbers = #tpu.dot_dimension_numbers<[1], [0], [0], [1], [0, 0, 1, 1], [], []>} : vector<16x32xf32>, vector<32x32xf32>, vector<16x32xf32> -> vector<16x32xf32>
    %c0_76 = arith.constant 0 : index
    %c0_77 = arith.constant 0 : index
    %249 = vector.load %arg8[%c0_76, %c0_77] : memref<1x32xf32, #tpu.memory_space<vmem>>, vector<1x32xf32>
    %250 = vector.broadcast %249 : vector<1x32xf32> to vector<16x32xf32>
    %251 = arith.addf %248, %250 : vector<16x32xf32>
    %c0_78 = arith.constant 0 : index
    %c0_79 = arith.constant 0 : index
    %252 = vector.load %arg9[%c0_78, %c0_79] : memref<16x32xf32, #tpu.memory_space<vmem>>, vector<16x32xf32>
    tpu.vector_store %arg9[%c0_78, %c0_79], %251 {strides = array<i32>} : memref<16x32xf32, #tpu.memory_space<vmem>>, vector<16x32xf32>,
    return
  }
  func.func @transform_0(%arg0: i32) -> (i32, i32) {
    %c0_i32 = arith.constant 0 : i32
    %c0_i32_0 = arith.constant 0 : i32
    %c0_i32_1 = arith.constant 0 : i32
    return %c0_i32, %c0_i32_0 : i32, i32
  }
  func.func @transform_1(%arg0: i32) -> (i32, i32) {
    %c0_i32 = arith.constant 0 : i32
    %c0_i32_0 = arith.constant 0 : i32
    %c0_i32_1 = arith.constant 0 : i32
    return %c0_i32, %c0_i32_0 : i32, i32
  }
  func.func @transform_2(%arg0: i32) -> (i32, i32) {
    %c0_i32 = arith.constant 0 : i32
    %c0_i32_0 = arith.constant 0 : i32
    %c0_i32_1 = arith.constant 0 : i32
    return %c0_i32, %c0_i32_0 : i32, i32
  }
  func.func @transform_3(%arg0: i32) -> (i32, i32) {
    %c0_i32 = arith.constant 0 : i32
    %c0_i32_0 = arith.constant 0 : i32
    %c0_i32_1 = arith.constant 0 : i32
    return %c0_i32, %c0_i32_0 : i32, i32
  }
  func.func @transform_4(%arg0: i32) -> (i32, i32) {
    %c0_i32 = arith.constant 0 : i32
    %c0_i32_0 = arith.constant 0 : i32
    %c0_i32_1 = arith.constant 0 : i32
    return %c0_i32, %c0_i32_0 : i32, i32
  }
  func.func @transform_5(%arg0: i32) -> (i32, i32) {
    %c0_i32 = arith.constant 0 : i32
    %c0_i32_0 = arith.constant 0 : i32
    %c0_i32_1 = arith.constant 0 : i32
    return %c0_i32, %c0_i32_0 : i32, i32
  }
  func.func @transform_6(%arg0: i32) -> (i32, i32) {
    %c0_i32 = arith.constant 0 : i32
    %c0_i32_0 = arith.constant 0 : i32
    %c0_i32_1 = arith.constant 0 : i32
    return %c0_i32, %c0_i32_0 : i32, i32
  }
  func.func @transform_7(%arg0: i32) -> (i32, i32) {
    %c0_i32 = arith.constant 0 : i32
    %c0_i32_0 = arith.constant 0 : i32
    %c0_i32_1 = arith.constant 0 : i32
    return %c0_i32, %c0_i32_0 : i32, i32
  }
  func.func @transform_8(%arg0: i32) -> (i32, i32) {
    %c0_i32 = arith.constant 0 : i32
    %c0_i32_0 = arith.constant 0 : i32
    %c0_i32_1 = arith.constant 0 : i32
    return %c0_i32, %c0_i32_0 : i32, i32
  }
}

</mosaic_0001>

<llo_original>
// kernel: decoder_forward.1
$region0: #{decoder_forward.1}
  #allocation0 [shape = 'u32[]', space=smem, size = 0x4, offset = 0x4, fixed_abs, tag = 'smem constant byte address 0x4 - core index']
  #allocation1 [shape = 'u32[144,128]{1,0:T(1,128)}', space=vmem, size = 0x12000, scoped, tag = 'internal scratch']
  #allocation2 [shape = 'f32[8,2,96]{2,1,0:T(2,128)}', space=vmem, size = 0x2000, scoped, tag = 'scratch operand']
  #allocation3 [shape = 'f32[8,2,32]{2,1,0:T(2,128)}', space=vmem, size = 0x2000, scoped, tag = 'scratch operand']
  %s0 = inlined_call_operand.vmem [shape: f32[16,32], index: 0, kind: input, shape index: {}]
  %s1 = inlined_call_operand.vmem [shape: f32[2,32], index: 1, kind: input, shape index: {}]
  %s2 = inlined_call_operand.vmem [shape: f32[32,96], index: 2, kind: input, shape index: {}]
  %s3 = inlined_call_operand.hbm [shape: f32[32,96], index: 3, kind: input, shape index: {}]
  %s4 = inlined_call_operand.vmem [shape: f32[1,96], index: 4, kind: input, shape index: {}]
  %s5 = inlined_call_operand.vmem [shape: f32[1,32], index: 5, kind: input, shape index: {}]
  %s6 = inlined_call_operand.hbm [shape: f32[32,32], index: 6, kind: input, shape index: {}]
  %s7 = inlined_call_operand.vmem [shape: f32[1,32], index: 7, kind: input, shape index: {}]
  %s8 = inlined_call_operand.vmem [shape: f32[16,32], index: 8, kind: output, shape index: {}]
  %s9 = sld [smem:[#allocation0]]
  $region50: #{decoder_forward.1} parent=0
    _
  %s11 = ssub.s32 1, %s9
  %s12 = scalar_select 0, %s11, %s9
  $region1: #{decoder_forward.1} parent=0
    #allocation4 [shape = 'u8[16384]{0}', space=vmem, size = 0x4000, scoped, tag = 'input window, operand 3, single buffered']
    #allocation5 [shape = 's32[1]{0}', space=sflag, size = 0x4, scoped, tag = 'scoped memory for decoder_forward.1']
    #allocation6 [shape = 'u8[16384]{0}', space=vmem, size = 0x4000, scoped, tag = 'input window, operand 6, single buffered']
    #allocation7 [shape = 's32[1]{0}', space=sflag, size = 0x4, scoped, tag = 'scoped memory for decoder_forward.1']
    %13 = vsyncpa [#allocation5], 0
    %14 = vsyncpa [#allocation7], 0
    // Predicated region
    $region2: #{decoder_forward.1} parent=1 // pred_check
      _
    $region3: #{decoder_forward.1} parent=1 // pred_check_branch
      %16 = sbr.rel (0) target = $region5
    $region4: #{decoder_forward.1} parent=1 // pred_region
      _
    $region5: #{decoder_forward.1} parent=1 // pred_fallthru
      _
    // Predicated region
    $region6: #{decoder_forward.1} parent=1 // pred_check
      _
    $region7: #{decoder_forward.1} parent=1 // pred_check_branch
      %18 = sbr.rel (0) target = $region9
    $region8: #{decoder_forward.1} parent=1 // pred_region
      _
    $region9: #{decoder_forward.1} parent=1 // pred_fallthru
      _
    // Predicated region
    $region10: #{decoder_forward.1} parent=1 // pred_check
      _
    $region11: #{decoder_forward.1} parent=1 // pred_check_branch
      %20 = sbr.rel (0) target = $region13
    $region12: #{decoder_forward.1} parent=1 // pred_region
      _
    $region13: #{decoder_forward.1} parent=1 // pred_fallthru
      _
    // Predicated region
    $region14: #{decoder_forward.1} parent=1 // pred_check
      _
    $region15: #{decoder_forward.1} parent=1 // pred_check_branch
      %22 = sbr.rel (0) target = $region17
    $region16: #{decoder_forward.1} parent=1 // pred_region
      %s24 = ssub.s32 512, 512
      %25 = vsyncadd [#allocation5], %s24
      %s26 = sshll.u32 [#allocation4], 4
      %s27 = int_to_ptr.vmem [resolvable:$true] %s26
      %32 = dma.hbm_to_vmem [thread:$0]  %s3, 512, %s27, [#allocation5], 128, 128, 8
    $region17: #{decoder_forward.1} parent=1 // pred_fallthru
      _
    // Predicated region
    $region18: #{decoder_forward.1} parent=1 // pred_check
      _
    $region19: #{decoder_forward.1} parent=1 // pred_check_branch
      %34 = sbr.rel (0) target = $region21
    $region20: #{decoder_forward.1} parent=1 // pred_region
      _
    $region21: #{decoder_forward.1} parent=1 // pred_fallthru
      _
    // Predicated region
    $region22: #{decoder_forward.1} parent=1 // pred_check
      _
    $region23: #{decoder_forward.1} parent=1 // pred_check_branch
      %36 = sbr.rel (0) target = $region25
    $region24: #{decoder_forward.1} parent=1 // pred_region
      _
    $region25: #{decoder_forward.1} parent=1 // pred_fallthru
      _
    // Predicated region
    $region26: #{decoder_forward.1} parent=1 // pred_check
      _
    $region27: #{decoder_forward.1} parent=1 // pred_check_branch
      %38 = sbr.rel (0) target = $region29
    $region28: #{decoder_forward.1} parent=1 // pred_region
      %s40 = ssub.s32 512, 512
      %41 = vsyncadd [#allocation7], %s40
      %s42 = sshll.u32 [#allocation6], 4
      %s43 = int_to_ptr.vmem [resolvable:$true] %s42
      %48 = dma.hbm_to_vmem [thread:$0]  %s6, 512, %s43, [#allocation7], 128, 128, 8
    $region29: #{decoder_forward.1} parent=1 // pred_fallthru
      _
    // Predicated region
    $region30: #{decoder_forward.1} parent=1 // pred_check
      _
    $region31: #{decoder_forward.1} parent=1 // pred_check_branch
      %50 = sbr.rel (0) target = $region33
    $region32: #{decoder_forward.1} parent=1 // pred_region
      _
    $region33: #{decoder_forward.1} parent=1 // pred_fallthru
      _
    // Predicated region
    $region34: #{decoder_forward.1} parent=1 // pred_check
      _
    $region35: #{decoder_forward.1} parent=1 // pred_check_branch
      %52 = sbr.rel (0) target = $region37
    $region36: #{decoder_forward.1} parent=1 // pred_region
      %53 = dma.done [#allocation5], 512
    $region37: #{decoder_forward.1} parent=1 // pred_fallthru
      _
    // Predicated region
    $region38: #{decoder_forward.1} parent=1 // pred_check
      _
    $region39: #{decoder_forward.1} parent=1 // pred_check_branch
      %55 = sbr.rel (0) target = $region41
    $region40: #{decoder_forward.1} parent=1 // pred_region
      %56 = dma.done [#allocation7], 512
    $region41: #{decoder_forward.1} parent=1 // pred_fallthru
      _
    %v57 = vld [vmem:[%s1] sm:$0x3]
    %v58 = vld [vmem:[%s0] sm:$0xff]
    %v59 = vld [vmem:[%s0 + $0x8] sm:$0xff]
    %v60 = vld [vmem:[%s2] sm:$0xff]
    %v61 = vld [vmem:[%s2 + $0x8] sm:$0xff]
    %v62 = vld [vmem:[%s2 + $0x10] sm:$0xff]
    %v63 = vld [vmem:[%s2 + $0x18] sm:$0xff]
    %v64 = vld [vmem:[#allocation4] sm:$0xff]
    %v65 = vld [vmem:[#allocation4 + $0x8] sm:$0xff]
    %v66 = vld [vmem:[#allocation4 + $0x10] sm:$0xff]
    %v67 = vld [vmem:[#allocation4 + $0x18] sm:$0xff]
    %v68 = vld [vmem:[%s4] sm:$0x1]
    %v69 = vld [vmem:[%s5] sm:$0x1]
    %v71 = vlaneseq
    %v72 = vshrl.u32 %v71, 7
    %v73 = vsub.s32 0, %v72
    %v74 = vrot.slane %v69, %v73
    %v76 = vlaneseq
    %v77 = vshrl.u32 %v76, 7
    %v78 = vsub.s32 0, %v77
    %v79 = vrot.slane %v68, %v78
    %vm81 = vcmask 261120
    %v83 = vsel %vm81, %v58, 0
    %v86 = vsel %vm81, %v59, 0
    %88 = vmatprep.subr.mxu0 0.0
    %89 = vmatpush1.msra.mxu0 %v60
    %90 = vmatprep.subr.mxu0 0.0
    %91 = vmatpush1.msra.mxu0 %v61
    %92 = vmatprep.subr.mxu0 0.0
    %93 = vmatpush1.msra.mxu0 %v62
    %94 = vmatprep.subr.mxu0 0.0
    %95 = vmatpush1.msra.mxu0 %v63
    %96 = vmatprep.subr.mxu0 0.0
    %97 = vmatpush1.msra.mxu0 0.0
    %98 = vmatprep.subr.mxu0 0.0
    %99 = vmatpush1.msra.mxu0 0.0
    %100 = vmatprep.subr.mxu0 0.0
    %101 = vmatpush1.msra.mxu0 0.0
    %102 = vmatprep.subr.mxu0 0.0
    %103 = vmatpush1.msra.mxu0 0.0
    %104 = vmatprep.subr.mxu0 0.0
    %105 = vmatpush1.msra.mxu0 0.0
    %106 = vmatprep.subr.mxu0 0.0
    %107 = vmatpush1.msra.mxu0 0.0
    %108 = vmatprep.subr.mxu0 0.0
    %109 = vmatpush1.msra.mxu0 0.0
    %110 = vmatprep.subr.mxu0 0.0
    %111 = vmatpush1.msra.mxu0 0.0
    %112 = vmatprep.subr.mxu0 0.0
    %113 = vmatpush1.msra.mxu0 0.0
    %114 = vmatprep.subr.mxu0 0.0
    %115 = vmatpush1.msra.mxu0 0.0
    %116 = vmatprep.subr.mxu0 0.0
    %117 = vmatpush1.msra.mxu0 0.0
    %118 = vmatprep.subr.mxu0 0.0
    %119 = vmatpush1.msra.mxu0 0.0
    %120 = vmatprep.subr.mxu0 0.0
    %121 = vmatpush1.msra.mxu0 0.0
    %122 = vmatprep.subr.mxu0 0.0
    %123 = vmatpush1.msra.mxu0 0.0
    %124 = vmatprep.subr.mxu0 0.0
    %125 = vmatpush1.msra.mxu0 0.0
    %126 = vmatprep.subr.mxu0 0.0
    %127 = vmatpush1.msra.mxu0 0.0
    %128 = vmatprep.subr.mxu0 0.0
    %129 = vmatpush1.msra.mxu0 0.0
    %130 = vmatprep.subr.mxu0 0.0
    %131 = vmatpush1.msra.mxu0 0.0
    %132 = vmatprep.subr.mxu0 0.0
    %133 = vmatpush1.msra.mxu0 0.0
    %134 = vmatprep.subr.mxu0 0.0
    %135 = vmatpush1.msra.mxu0 0.0
    %136 = vmatprep.subr.mxu0 0.0
    %137 = vmatpush1.msra.mxu0 0.0
    %138 = vmatprep.subr.mxu0 0.0
    %139 = vmatpush1.msra.mxu0 0.0
    %140 = vmatprep.subr.mxu0 0.0
    %141 = vmatpush1.msra.mxu0 0.0
    %142 = vmatprep.subr.mxu0 0.0
    %143 = vmatpush1.msra.mxu0 0.0
    %144 = vmatprep.subr.mxu0 0.0
    %145 = vmatpush1.msra.mxu0 0.0
    %146 = vmatprep.subr.mxu0 0.0
    %147 = vmatpush1.msra.mxu0 0.0
    %148 = vmatprep.subr.mxu0 0.0
    %149 = vmatpush1.msra.mxu0 0.0
    %150 = vmatprep.subr.mxu0 0.0
    %151 = vmatpush1.msra.mxu0 0.0
    %152 = vmatprep.mubr.f32.mxu0 0.0
    %153 = vmatmul.mubr.f32.gmra.mrb[0].mxu0 %v83
    %v154 = vpop.f32.mrb[0].mxu0
    %v155 = vadd.f32 %v79, %v154
    %v156 = vpop.f32.mrb[0].mxu0
    %157 = vmatprep.mubr.f32.mxu0 0.0
    %158 = vmatmul.mubr.f32.gmra.mrb[0].mxu0 %v86
    %v159 = vpop.f32.mrb[0].mxu0
    %v160 = vadd.f32 %v79, %v159
    %v161 = vpop.f32.mrb[0].mxu0
    %162 = vdwg.mxu0
    %v165 = vcombine.high %v155, %v155
    %v167 = vunpack.c.l.s4 1983009808
    %v168 = vunpack.c.0.s8 %v167
    %v169 = vlaneseq
    %v170 = vshrl.u32 %v169, 7
    %v171 = vsub.s32 %v168, %v170
    %v172 = vrot.slane %v155, %v171
    %v174 = vunpack.c.l.s4 1983009808
    %v175 = vunpack.c.0.s8 %v174
    %v176 = vlaneseq
    %v177 = vshrl.u32 %v176, 7
    %v178 = vsub.s32 %v175, %v177
    %v179 = vrot.slane %v165, %v178
    %v180 = vcombine.high %v172, %v172
    %v181 = vcombine.high %v179, %v179
    %v182 = vcombine.high %v160, %v160
    %v184 = vunpack.c.l.s4 1983009808
    %v185 = vunpack.c.0.s8 %v184
    %v186 = vlaneseq
    %v187 = vshrl.u32 %v186, 7
    %v188 = vsub.s32 %v185, %v187
    %v189 = vrot.slane %v160, %v188
    %v191 = vunpack.c.l.s4 1983009808
    %v192 = vunpack.c.0.s8 %v191
    %v193 = vlaneseq
    %v194 = vshrl.u32 %v193, 7
    %v195 = vsub.s32 %v192, %v194
    %v196 = vrot.slane %v182, %v195
    %v197 = vcombine.high %v189, %v189
    %v198 = vcombine.high %v196, %v196
    %vm207 = vcmask 779264
    %208 = vst.msk [vmem:[#allocation2] sm:$0x3] %vm207, %v172
    %209 = vst.msk [vmem:[#allocation2 + $0x2] sm:$0x3] %vm207, %v180
    %210 = vst.msk [vmem:[#allocation2 + $0x4] sm:$0x3] %vm207, %v179
    %211 = vst.msk [vmem:[#allocation2 + $0x6] sm:$0x3] %vm207, %v181
    %212 = vst.msk [vmem:[#allocation2 + $0x8] sm:$0x3] %vm207, %v189
    %213 = vst.msk [vmem:[#allocation2 + $0xa] sm:$0x3] %vm207, %v197
    %214 = vst.msk [vmem:[#allocation2 + $0xc] sm:$0x3] %vm207, %v196
    %215 = vst.msk [vmem:[#allocation2 + $0xe] sm:$0x3] %vm207, %v198
    %v216 = vld [vmem:[#allocation2] sm:$0x3]
    %v218 = vsel %vm81, %v57, 0
    %220 = vmatprep.subr.mxu0 0.0
    %221 = vmatpush1.msra.mxu0 %v64
    %222 = vmatprep.subr.mxu0 0.0
    %223 = vmatpush1.msra.mxu0 %v65
    %224 = vmatprep.subr.mxu0 0.0
    %225 = vmatpush1.msra.mxu0 %v66
    %226 = vmatprep.subr.mxu0 0.0
    %227 = vmatpush1.msra.mxu0 %v67
    %228 = vmatprep.subr.mxu0 0.0
    %229 = vmatpush1.msra.mxu0 0.0
    %230 = vmatprep.subr.mxu0 0.0
    %231 = vmatpush1.msra.mxu0 0.0
    %232 = vmatprep.subr.mxu0 0.0
    %233 = vmatpush1.msra.mxu0 0.0
    %234 = vmatprep.subr.mxu0 0.0
    %235 = vmatpush1.msra.mxu0 0.0
    %236 = vmatprep.subr.mxu0 0.0
    %237 = vmatpush1.msra.mxu0 0.0
    %238 = vmatprep.subr.mxu0 0.0
    %239 = vmatpush1.msra.mxu0 0.0
    %240 = vmatprep.subr.mxu0 0.0
    %241 = vmatpush1.msra.mxu0 0.0
    %242 = vmatprep.subr.mxu0 0.0
    %243 = vmatpush1.msra.mxu0 0.0
    %244 = vmatprep.subr.mxu0 0.0
    %245 = vmatpush1.msra.mxu0 0.0
    %246 = vmatprep.subr.mxu0 0.0
    %247 = vmatpush1.msra.mxu0 0.0
    %248 = vmatprep.subr.mxu0 0.0
    %249 = vmatpush1.msra.mxu0 0.0
    %250 = vmatprep.subr.mxu0 0.0
    %251 = vmatpush1.msra.mxu0 0.0
    %252 = vmatprep.subr.mxu0 0.0
    %253 = vmatpush1.msra.mxu0 0.0
    %254 = vmatprep.subr.mxu0 0.0
    %255 = vmatpush1.msra.mxu0 0.0
    %256 = vmatprep.subr.mxu0 0.0
    %257 = vmatpush1.msra.mxu0 0.0
    %258 = vmatprep.subr.mxu0 0.0
    %259 = vmatpush1.msra.mxu0 0.0
    %260 = vmatprep.subr.mxu0 0.0
    %261 = vmatpush1.msra.mxu0 0.0
    %262 = vmatprep.subr.mxu0 0.0
    %263 = vmatpush1.msra.mxu0 0.0
    %264 = vmatprep.subr.mxu0 0.0
    %265 = vmatpush1.msra.mxu0 0.0
    %266 = vmatprep.subr.mxu0 0.0
    %267 = vmatpush1.msra.mxu0 0.0
    %268 = vmatprep.subr.mxu0 0.0
    %269 = vmatpush1.msra.mxu0 0.0
    %270 = vmatprep.subr.mxu0 0.0
    %271 = vmatpush1.msra.mxu0 0.0
    %272 = vmatprep.subr.mxu0 0.0
    %273 = vmatpush1.msra.mxu0 0.0
    %274 = vmatprep.subr.mxu0 0.0
    %275 = vmatpush1.msra.mxu0 0.0
    %276 = vmatprep.subr.mxu0 0.0
    %277 = vmatpush1.msra.mxu0 0.0
    %278 = vmatprep.subr.mxu0 0.0
    %279 = vmatpush1.msra.mxu0 0.0
    %280 = vmatprep.subr.mxu0 0.0
    %281 = vmatpush1.msra.mxu0 0.0
    %282 = vmatprep.subr.mxu0 0.0
    %283 = vmatpush1.msra.mxu0 0.0
    %284 = vmatprep.mubr.f32.mxu0 0.0
    %285 = vmatmul.mubr.f32.gmra.mrb[0].mxu0 %v218
    %v286 = vpop.f32.mrb[0].mxu0
    %v287 = vadd.f32 0.0, %v286
    %v288 = vpop.f32.mrb[0].mxu0
    %289 = vdwg.mxu0
    %v290 = vadd.f32 %v216, %v287
    %v291 = vxor.u32 %v290, 2147483648
    %v292 = vmul.f32 %v291, 1.442695
    %v293 = vpow.pop %v292
    %v294 = vadd.f32 %v293, 1.0
    %v295 = vrcp.pop %v294
    %v296 = vmul.f32 1.0, %v295
    %297 = vrot.lane.b32.xlu0 %v74, 64
    %v298 = vpop.permute.xlu0 %297
    %v300 = vadd.f32 %v287, %v298
    %302 = vrot.lane.b32.xlu0 %v300, 64
    %v303 = vpop.permute.xlu0 %302
    %v305 = vmul.f32 %v296, %v303
    %307 = vrot.lane.b32.xlu0 %v305, 64
    %v308 = vpop.permute.xlu0 %307
    %v310 = vadd.f32 %v216, %v308
    %v311 = vtanh.pop %v310
    %v312 = vsub.f32 1.0, %v296
    %314 = vrot.lane.b32.xlu0 %v311, 96
    %v315 = vpop.permute.xlu0 %314
    %v317 = vmul.f32 %v312, %v315
    %318 = vrot.lane.b32.xlu0 %v57, 32
    %v319 = vpop.permute.xlu0 %318
    %v321 = vmul.f32 %v296, %v319
    %v322 = vadd.f32 %v317, %v321
    %324 = vrot.lane.b32.xlu0 %v322, 96
    %v325 = vpop.permute.xlu0 %324
    %vm327 = vcmask 254976
    %328 = vst.msk [vmem:[#allocation3] sm:$0x3] %vm327, %v325
    %s329 = scalar_lea.vmem [#allocation2], 2
    %v330 = vld [vmem:[%s329] sm:$0x3]
    %v331 = vsel %vm81, %v325, 0
    %333 = vmatprep.subr.mxu0 0.0
    %334 = vmatpush1.msra.mxu0 %v64
    %335 = vmatprep.subr.mxu0 0.0
    %336 = vmatpush1.msra.mxu0 %v65
    %337 = vmatprep.subr.mxu0 0.0
    %338 = vmatpush1.msra.mxu0 %v66
    %339 = vmatprep.subr.mxu0 0.0
    %340 = vmatpush1.msra.mxu0 %v67
    %341 = vmatprep.subr.mxu0 0.0
    %342 = vmatpush1.msra.mxu0 0.0
    %343 = vmatprep.subr.mxu0 0.0
    %344 = vmatpush1.msra.mxu0 0.0
    %345 = vmatprep.subr.mxu0 0.0
    %346 = vmatpush1.msra.mxu0 0.0
    %347 = vmatprep.subr.mxu0 0.0
    %348 = vmatpush1.msra.mxu0 0.0
    %349 = vmatprep.subr.mxu0 0.0
    %350 = vmatpush1.msra.mxu0 0.0
    %351 = vmatprep.subr.mxu0 0.0
    %352 = vmatpush1.msra.mxu0 0.0
    %353 = vmatprep.subr.mxu0 0.0
    %354 = vmatpush1.msra.mxu0 0.0
    %355 = vmatprep.subr.mxu0 0.0
    %356 = vmatpush1.msra.mxu0 0.0
    %357 = vmatprep.subr.mxu0 0.0
    %358 = vmatpush1.msra.mxu0 0.0
    %359 = vmatprep.subr.mxu0 0.0
    %360 = vmatpush1.msra.mxu0 0.0
    %361 = vmatprep.subr.mxu0 0.0
    %362 = vmatpush1.msra.mxu0 0.0
    %363 = vmatprep.subr.mxu0 0.0
    %364 = vmatpush1.msra.mxu0 0.0
    %365 = vmatprep.subr.mxu0 0.0
    %366 = vmatpush1.msra.mxu0 0.0
    %367 = vmatprep.subr.mxu0 0.0
    %368 = vmatpush1.msra.mxu0 0.0
    %369 = vmatprep.subr.mxu0 0.0
    %370 = vmatpush1.msra.mxu0 0.0
    %371 = vmatprep.subr.mxu0 0.0
    %372 = vmatpush1.msra.mxu0 0.0
    %373 = vmatprep.subr.mxu0 0.0
    %374 = vmatpush1.msra.mxu0 0.0
    %375 = vmatprep.subr.mxu0 0.0
    %376 = vmatpush1.msra.mxu0 0.0
    %377 = vmatprep.subr.mxu0 0.0
    %378 = vmatpush1.msra.mxu0 0.0
    %379 = vmatprep.subr.mxu0 0.0
    %380 = vmatpush1.msra.mxu0 0.0
    %381 = vmatprep.subr.mxu0 0.0
    %382 = vmatpush1.msra.mxu0 0.0
    %383 = vmatprep.subr.mxu0 0.0
    %384 = vmatpush1.msra.mxu0 0.0
    %385 = vmatprep.subr.mxu0 0.0
    %386 = vmatpush1.msra.mxu0 0.0
    %387 = vmatprep.subr.mxu0 0.0
    %388 = vmatpush1.msra.mxu0 0.0
    %389 = vmatprep.subr.mxu0 0.0
    %390 = vmatpush1.msra.mxu0 0.0
    %391 = vmatprep.subr.mxu0 0.0
    %392 = vmatpush1.msra.mxu0 0.0
    %393 = vmatprep.subr.mxu0 0.0
    %394 = vmatpush1.msra.mxu0 0.0
    %395 = vmatprep.subr.mxu0 0.0
    %396 = vmatpush1.msra.mxu0 0.0
    %397 = vmatprep.mubr.f32.mxu0 0.0
    %398 = vmatmul.mubr.f32.gmra.mrb[0].mxu0 %v331
    %v399 = vpop.f32.mrb[0].mxu0
    %v400 = vadd.f32 0.0, %v399
    %v401 = vpop.f32.mrb[0].mxu0
    %402 = vdwg.mxu0
    %v403 = vadd.f32 %v330, %v400
    %v404 = vxor.u32 %v403, 2147483648
    %v405 = vmul.f32 %v404, 1.442695
    %v406 = vpow.pop %v405
    %v407 = vadd.f32 %v406, 1.0
    %v408 = vrcp.pop %v407
    %v409 = vmul.f32 1.0, %v408
    %v410 = vadd.f32 %v400, %v298
    %412 = vrot.lane.b32.xlu0 %v410, 64
    %v413 = vpop.permute.xlu0 %412
    %v415 = vmul.f32 %v409, %v413
    %417 = vrot.lane.b32.xlu0 %v415, 64
    %v418 = vpop.permute.xlu0 %417
    %v420 = vadd.f32 %v330, %v418
    %v421 = vtanh.pop %v420
    %v422 = vsub.f32 1.0, %v409
    %424 = vrot.lane.b32.xlu0 %v421, 96
    %v425 = vpop.permute.xlu0 %424
    %v427 = vmul.f32 %v422, %v425
    %v428 = vmul.f32 %v409, %v322
    %v429 = vadd.f32 %v427, %v428
    %431 = vrot.lane.b32.xlu0 %v429, 96
    %v432 = vpop.permute.xlu0 %431
    %s434 = scalar_lea.vmem [#allocation3], 2
    %435 = vst.msk [vmem:[%s434] sm:$0x3] %vm327, %v432
    %s436 = scalar_lea.vmem [#allocation2], 4
    %v437 = vld [vmem:[%s436] sm:$0x3]
    %v438 = vsel %vm81, %v432, 0
    %440 = vmatprep.subr.mxu0 0.0
    %441 = vmatpush1.msra.mxu0 %v64
    %442 = vmatprep.subr.mxu0 0.0
    %443 = vmatpush1.msra.mxu0 %v65
    %444 = vmatprep.subr.mxu0 0.0
    %445 = vmatpush1.msra.mxu0 %v66
    %446 = vmatprep.subr.mxu0 0.0
    %447 = vmatpush1.msra.mxu0 %v67
    %448 = vmatprep.subr.mxu0 0.0
    %449 = vmatpush1.msra.mxu0 0.0
    %450 = vmatprep.subr.mxu0 0.0
    %451 = vmatpush1.msra.mxu0 0.0
    %452 = vmatprep.subr.mxu0 0.0
    %453 = vmatpush1.msra.mxu0 0.0
    %454 = vmatprep.subr.mxu0 0.0
    %455 = vmatpush1.msra.mxu0 0.0
    %456 = vmatprep.subr.mxu0 0.0
    %457 = vmatpush1.msra.mxu0 0.0
    %458 = vmatprep.subr.mxu0 0.0
    %459 = vmatpush1.msra.mxu0 0.0
    %460 = vmatprep.subr.mxu0 0.0
    %461 = vmatpush1.msra.mxu0 0.0
    %462 = vmatprep.subr.mxu0 0.0
    %463 = vmatpush1.msra.mxu0 0.0
    %464 = vmatprep.subr.mxu0 0.0
    %465 = vmatpush1.msra.mxu0 0.0
    %466 = vmatprep.subr.mxu0 0.0
    %467 = vmatpush1.msra.mxu0 0.0
    %468 = vmatprep.subr.mxu0 0.0
    %469 = vmatpush1.msra.mxu0 0.0
    %470 = vmatprep.subr.mxu0 0.0
    %471 = vmatpush1.msra.mxu0 0.0
    %472 = vmatprep.subr.mxu0 0.0
    %473 = vmatpush1.msra.mxu0 0.0
    %474 = vmatprep.subr.mxu0 0.0
    %475 = vmatpush1.msra.mxu0 0.0
    %476 = vmatprep.subr.mxu0 0.0
    %477 = vmatpush1.msra.mxu0 0.0
    %478 = vmatprep.subr.mxu0 0.0
    %479 = vmatpush1.msra.mxu0 0.0
    %480 = vmatprep.subr.mxu0 0.0
    %481 = vmatpush1.msra.mxu0 0.0
    %482 = vmatprep.subr.mxu0 0.0
    %483 = vmatpush1.msra.mxu0 0.0
    %484 = vmatprep.subr.mxu0 0.0
    %485 = vmatpush1.msra.mxu0 0.0
    %486 = vmatprep.subr.mxu0 0.0
    %487 = vmatpush1.msra.mxu0 0.0
    %488 = vmatprep.subr.mxu0 0.0
    %489 = vmatpush1.msra.mxu0 0.0
    %490 = vmatprep.subr.mxu0 0.0
    %491 = vmatpush1.msra.mxu0 0.0
    %492 = vmatprep.subr.mxu0 0.0
    %493 = vmatpush1.msra.mxu0 0.0
    %494 = vmatprep.subr.mxu0 0.0
    %495 = vmatpush1.msra.mxu0 0.0
    %496 = vmatprep.subr.mxu0 0.0
    %497 = vmatpush1.msra.mxu0 0.0
    %498 = vmatprep.subr.mxu0 0.0
    %499 = vmatpush1.msra.mxu0 0.0
    %500 = vmatprep.subr.mxu0 0.0
    %501 = vmatpush1.msra.mxu0 0.0
    %502 = vmatprep.subr.mxu0 0.0
    %503 = vmatpush1.msra.mxu0 0.0
    %504 = vmatprep.mubr.f32.mxu0 0.0
    %505 = vmatmul.mubr.f32.gmra.mrb[0].mxu0 %v438
    %v506 = vpop.f32.mrb[0].mxu0
    %v507 = vadd.f32 0.0, %v506
    %v508 = vpop.f32.mrb[0].mxu0
    %509 = vdwg.mxu0
    %v510 = vadd.f32 %v437, %v507
    %v511 = vxor.u32 %v510, 2147483648
    %v512 = vmul.f32 %v511, 1.442695
    %v513 = vpow.pop %v512
    %v514 = vadd.f32 %v513, 1.0
    %v515 = vrcp.pop %v514
    %v516 = vmul.f32 1.0, %v515
    %v517 = vadd.f32 %v507, %v298
    %519 = vrot.lane.b32.xlu0 %v517, 64
    %v520 = vpop.permute.xlu0 %519
    %v522 = vmul.f32 %v516, %v520
    %524 = vrot.lane.b32.xlu0 %v522, 64
    %v525 = vpop.permute.xlu0 %524
    %v527 = vadd.f32 %v437, %v525
    %v528 = vtanh.pop %v527
    %v529 = vsub.f32 1.0, %v516
    %531 = vrot.lane.b32.xlu0 %v528, 96
    %v532 = vpop.permute.xlu0 %531
    %v534 = vmul.f32 %v529, %v532
    %v535 = vmul.f32 %v516, %v429
    %v536 = vadd.f32 %v534, %v535
    %538 = vrot.lane.b32.xlu0 %v536, 96
    %v539 = vpop.permute.xlu0 %538
    %s541 = scalar_lea.vmem [#allocation3], 4
    %542 = vst.msk [vmem:[%s541] sm:$0x3] %vm327, %v539
    %s543 = scalar_lea.vmem [#allocation2], 6
    %v544 = vld [vmem:[%s543] sm:$0x3]
    %v545 = vsel %vm81, %v539, 0
    %547 = vmatprep.subr.mxu0 0.0
    %548 = vmatpush1.msra.mxu0 %v64
    %549 = vmatprep.subr.mxu0 0.0
    %550 = vmatpush1.msra.mxu0 %v65
    %551 = vmatprep.subr.mxu0 0.0
    %552 = vmatpush1.msra.mxu0 %v66
    %553 = vmatprep.subr.mxu0 0.0
    %554 = vmatpush1.msra.mxu0 %v67
    %555 = vmatprep.subr.mxu0 0.0
    %556 = vmatpush1.msra.mxu0 0.0
    %557 = vmatprep.subr.mxu0 0.0
    %558 = vmatpush1.msra.mxu0 0.0
    %559 = vmatprep.subr.mxu0 0.0
    %560 = vmatpush1.msra.mxu0 0.0
    %561 = vmatprep.subr.mxu0 0.0
    %562 = vmatpush1.msra.mxu0 0.0
    %563 = vmatprep.subr.mxu0 0.0
    %564 = vmatpush1.msra.mxu0 0.0
    %565 = vmatprep.subr.mxu0 0.0
    %566 = vmatpush1.msra.mxu0 0.0
    %567 = vmatprep.subr.mxu0 0.0
    %568 = vmatpush1.msra.mxu0 0.0
    %569 = vmatprep.subr.mxu0 0.0
    %570 = vmatpush1.msra.mxu0 0.0
    %571 = vmatprep.subr.mxu0 0.0
    %572 = vmatpush1.msra.mxu0 0.0
    %573 = vmatprep.subr.mxu0 0.0
    %574 = vmatpush1.msra.mxu0 0.0
    %575 = vmatprep.subr.mxu0 0.0
    %576 = vmatpush1.msra.mxu0 0.0
    %577 = vmatprep.subr.mxu0 0.0
    %578 = vmatpush1.msra.mxu0 0.0
    %579 = vmatprep.subr.mxu0 0.0
    %580 = vmatpush1.msra.mxu0 0.0
    %581 = vmatprep.subr.mxu0 0.0
    %582 = vmatpush1.msra.mxu0 0.0
    %583 = vmatprep.subr.mxu0 0.0
    %584 = vmatpush1.msra.mxu0 0.0
    %585 = vmatprep.subr.mxu0 0.0
    %586 = vmatpush1.msra.mxu0 0.0
    %587 = vmatprep.subr.mxu0 0.0
    %588 = vmatpush1.msra.mxu0 0.0
    %589 = vmatprep.subr.mxu0 0.0
    %590 = vmatpush1.msra.mxu0 0.0
    %591 = vmatprep.subr.mxu0 0.0
    %592 = vmatpush1.msra.mxu0 0.0
    %593 = vmatprep.subr.mxu0 0.0
    %594 = vmatpush1.msra.mxu0 0.0
    %595 = vmatprep.subr.mxu0 0.0
    %596 = vmatpush1.msra.mxu0 0.0
    %597 = vmatprep.subr.mxu0 0.0
    %598 = vmatpush1.msra.mxu0 0.0
    %599 = vmatprep.subr.mxu0 0.0
    %600 = vmatpush1.msra.mxu0 0.0
    %601 = vmatprep.subr.mxu0 0.0
    %602 = vmatpush1.msra.mxu0 0.0
    %603 = vmatprep.subr.mxu0 0.0
    %604 = vmatpush1.msra.mxu0 0.0
    %605 = vmatprep.subr.mxu0 0.0
    %606 = vmatpush1.msra.mxu0 0.0
    %607 = vmatprep.subr.mxu0 0.0
    %608 = vmatpush1.msra.mxu0 0.0
    %609 = vmatprep.subr.mxu0 0.0
    %610 = vmatpush1.msra.mxu0 0.0
    %611 = vmatprep.mubr.f32.mxu0 0.0
    %612 = vmatmul.mubr.f32.gmra.mrb[0].mxu0 %v545
    %v613 = vpop.f32.mrb[0].mxu0
    %v614 = vadd.f32 0.0, %v613
    %v615 = vpop.f32.mrb[0].mxu0
    %616 = vdwg.mxu0
    %v617 = vadd.f32 %v544, %v614
    %v618 = vxor.u32 %v617, 2147483648
    %v619 = vmul.f32 %v618, 1.442695
    %v620 = vpow.pop %v619
    %v621 = vadd.f32 %v620, 1.0
    %v622 = vrcp.pop %v621
    %v623 = vmul.f32 1.0, %v622
    %v624 = vadd.f32 %v614, %v298
    %626 = vrot.lane.b32.xlu0 %v624, 64
    %v627 = vpop.permute.xlu0 %626
    %v629 = vmul.f32 %v623, %v627
    %631 = vrot.lane.b32.xlu0 %v629, 64
    %v632 = vpop.permute.xlu0 %631
    %v634 = vadd.f32 %v544, %v632
    %v635 = vtanh.pop %v634
    %v636 = vsub.f32 1.0, %v623
    %638 = vrot.lane.b32.xlu0 %v635, 96
    %v639 = vpop.permute.xlu0 %638
    %v641 = vmul.f32 %v636, %v639
    %v642 = vmul.f32 %v623, %v536
    %v643 = vadd.f32 %v641, %v642
    %645 = vrot.lane.b32.xlu0 %v643, 96
    %v646 = vpop.permute.xlu0 %645
    %s648 = scalar_lea.vmem [#allocation3], 6
    %649 = vst.msk [vmem:[%s648] sm:$0x3] %vm327, %v646
    %s650 = scalar_lea.vmem [#allocation2], 8
    %v651 = vld [vmem:[%s650] sm:$0x3]
    %v652 = vsel %vm81, %v646, 0
    %654 = vmatprep.subr.mxu0 0.0
    %655 = vmatpush1.msra.mxu0 %v64
    %656 = vmatprep.subr.mxu0 0.0
    %657 = vmatpush1.msra.mxu0 %v65
    %658 = vmatprep.subr.mxu0 0.0
    %659 = vmatpush1.msra.mxu0 %v66
    %660 = vmatprep.subr.mxu0 0.0
    %661 = vmatpush1.msra.mxu0 %v67
    %662 = vmatprep.subr.mxu0 0.0
    %663 = vmatpush1.msra.mxu0 0.0
    %664 = vmatprep.subr.mxu0 0.0
    %665 = vmatpush1.msra.mxu0 0.0
    %666 = vmatprep.subr.mxu0 0.0
    %667 = vmatpush1.msra.mxu0 0.0
    %668 = vmatprep.subr.mxu0 0.0
    %669 = vmatpush1.msra.mxu0 0.0
    %670 = vmatprep.subr.mxu0 0.0
    %671 = vmatpush1.msra.mxu0 0.0
    %672 = vmatprep.subr.mxu0 0.0
    %673 = vmatpush1.msra.mxu0 0.0
    %674 = vmatprep.subr.mxu0 0.0
    %675 = vmatpush1.msra.mxu0 0.0
    %676 = vmatprep.subr.mxu0 0.0
    %677 = vmatpush1.msra.mxu0 0.0
    %678 = vmatprep.subr.mxu0 0.0
    %679 = vmatpush1.msra.mxu0 0.0
    %680 = vmatprep.subr.mxu0 0.0
    %681 = vmatpush1.msra.mxu0 0.0
    %682 = vmatprep.subr.mxu0 0.0
    %683 = vmatpush1.msra.mxu0 0.0
    %684 = vmatprep.subr.mxu0 0.0
    %685 = vmatpush1.msra.mxu0 0.0
    %686 = vmatprep.subr.mxu0 0.0
    %687 = vmatpush1.msra.mxu0 0.0
    %688 = vmatprep.subr.mxu0 0.0
    %689 = vmatpush1.msra.mxu0 0.0
    %690 = vmatprep.subr.mxu0 0.0
    %691 = vmatpush1.msra.mxu0 0.0
    %692 = vmatprep.subr.mxu0 0.0
    %693 = vmatpush1.msra.mxu0 0.0
    %694 = vmatprep.subr.mxu0 0.0
    %695 = vmatpush1.msra.mxu0 0.0
    %696 = vmatprep.subr.mxu0 0.0
    %697 = vmatpush1.msra.mxu0 0.0
    %698 = vmatprep.subr.mxu0 0.0
    %699 = vmatpush1.msra.mxu0 0.0
    %700 = vmatprep.subr.mxu0 0.0
    %701 = vmatpush1.msra.mxu0 0.0
    %702 = vmatprep.subr.mxu0 0.0
    %703 = vmatpush1.msra.mxu0 0.0
    %704 = vmatprep.subr.mxu0 0.0
    %705 = vmatpush1.msra.mxu0 0.0
    %706 = vmatprep.subr.mxu0 0.0
    %707 = vmatpush1.msra.mxu0 0.0
    %708 = vmatprep.subr.mxu0 0.0
    %709 = vmatpush1.msra.mxu0 0.0
    %710 = vmatprep.subr.mxu0 0.0
    %711 = vmatpush1.msra.mxu0 0.0
    %712 = vmatprep.subr.mxu0 0.0
    %713 = vmatpush1.msra.mxu0 0.0
    %714 = vmatprep.subr.mxu0 0.0
    %715 = vmatpush1.msra.mxu0 0.0
    %716 = vmatprep.subr.mxu0 0.0
    %717 = vmatpush1.msra.mxu0 0.0
    %718 = vmatprep.mubr.f32.mxu0 0.0
    %719 = vmatmul.mubr.f32.gmra.mrb[0].mxu0 %v652
    %v720 = vpop.f32.mrb[0].mxu0
    %v721 = vadd.f32 0.0, %v720
    %v722 = vpop.f32.mrb[0].mxu0
    %723 = vdwg.mxu0
    %v724 = vadd.f32 %v651, %v721
    %v725 = vxor.u32 %v724, 2147483648
    %v726 = vmul.f32 %v725, 1.442695
    %v727 = vpow.pop %v726
    %v728 = vadd.f32 %v727, 1.0
    %v729 = vrcp.pop %v728
    %v730 = vmul.f32 1.0, %v729
    %v731 = vadd.f32 %v721, %v298
    %733 = vrot.lane.b32.xlu0 %v731, 64
    %v734 = vpop.permute.xlu0 %733
    %v736 = vmul.f32 %v730, %v734
    %738 = vrot.lane.b32.xlu0 %v736, 64
    %v739 = vpop.permute.xlu0 %738
    %v741 = vadd.f32 %v651, %v739
    %v742 = vtanh.pop %v741
    %v743 = vsub.f32 1.0, %v730
    %745 = vrot.lane.b32.xlu0 %v742, 96
    %v746 = vpop.permute.xlu0 %745
    %v748 = vmul.f32 %v743, %v746
    %v749 = vmul.f32 %v730, %v643
    %v750 = vadd.f32 %v748, %v749
    %752 = vrot.lane.b32.xlu0 %v750, 96
    %v753 = vpop.permute.xlu0 %752
    %s755 = scalar_lea.vmem [#allocation3], 8
    %756 = vst.msk [vmem:[%s755] sm:$0x3] %vm327, %v753
    %s757 = scalar_lea.vmem [#allocation2], 10
    %v758 = vld [vmem:[%s757] sm:$0x3]
    %v759 = vsel %vm81, %v753, 0
    %761 = vmatprep.subr.mxu0 0.0
    %762 = vmatpush1.msra.mxu0 %v64
    %763 = vmatprep.subr.mxu0 0.0
    %764 = vmatpush1.msra.mxu0 %v65
    %765 = vmatprep.subr.mxu0 0.0
    %766 = vmatpush1.msra.mxu0 %v66
    %767 = vmatprep.subr.mxu0 0.0
    %768 = vmatpush1.msra.mxu0 %v67
    %769 = vmatprep.subr.mxu0 0.0
    %770 = vmatpush1.msra.mxu0 0.0
    %771 = vmatprep.subr.mxu0 0.0
    %772 = vmatpush1.msra.mxu0 0.0
    %773 = vmatprep.subr.mxu0 0.0
    %774 = vmatpush1.msra.mxu0 0.0
    %775 = vmatprep.subr.mxu0 0.0
    %776 = vmatpush1.msra.mxu0 0.0
    %777 = vmatprep.subr.mxu0 0.0
    %778 = vmatpush1.msra.mxu0 0.0
    %779 = vmatprep.subr.mxu0 0.0
    %780 = vmatpush1.msra.mxu0 0.0
    %781 = vmatprep.subr.mxu0 0.0
    %782 = vmatpush1.msra.mxu0 0.0
    %783 = vmatprep.subr.mxu0 0.0
    %784 = vmatpush1.msra.mxu0 0.0
    %785 = vmatprep.subr.mxu0 0.0
    %786 = vmatpush1.msra.mxu0 0.0
    %787 = vmatprep.subr.mxu0 0.0
    %788 = vmatpush1.msra.mxu0 0.0
    %789 = vmatprep.subr.mxu0 0.0
    %790 = vmatpush1.msra.mxu0 0.0
    %791 = vmatprep.subr.mxu0 0.0
    %792 = vmatpush1.msra.mxu0 0.0
    %793 = vmatprep.subr.mxu0 0.0
    %794 = vmatpush1.msra.mxu0 0.0
    %795 = vmatprep.subr.mxu0 0.0
    %796 = vmatpush1.msra.mxu0 0.0
    %797 = vmatprep.subr.mxu0 0.0
    %798 = vmatpush1.msra.mxu0 0.0
    %799 = vmatprep.subr.mxu0 0.0
    %800 = vmatpush1.msra.mxu0 0.0
    %801 = vmatprep.subr.mxu0 0.0
    %802 = vmatpush1.msra.mxu0 0.0
    %803 = vmatprep.subr.mxu0 0.0
    %804 = vmatpush1.msra.mxu0 0.0
    %805 = vmatprep.subr.mxu0 0.0
    %806 = vmatpush1.msra.mxu0 0.0
    %807 = vmatprep.subr.mxu0 0.0
    %808 = vmatpush1.msra.mxu0 0.0
    %809 = vmatprep.subr.mxu0 0.0
    %810 = vmatpush1.msra.mxu0 0.0
    %811 = vmatprep.subr.mxu0 0.0
    %812 = vmatpush1.msra.mxu0 0.0
    %813 = vmatprep.subr.mxu0 0.0
    %814 = vmatpush1.msra.mxu0 0.0
    %815 = vmatprep.subr.mxu0 0.0
    %816 = vmatpush1.msra.mxu0 0.0
    %817 = vmatprep.subr.mxu0 0.0
    %818 = vmatpush1.msra.mxu0 0.0
    %819 = vmatprep.subr.mxu0 0.0
    %820 = vmatpush1.msra.mxu0 0.0
    %821 = vmatprep.subr.mxu0 0.0
    %822 = vmatpush1.msra.mxu0 0.0
    %823 = vmatprep.subr.mxu0 0.0
    %824 = vmatpush1.msra.mxu0 0.0
    %825 = vmatprep.mubr.f32.mxu0 0.0
    %826 = vmatmul.mubr.f32.gmra.mrb[0].mxu0 %v759
    %v827 = vpop.f32.mrb[0].mxu0
    %v828 = vadd.f32 0.0, %v827
    %v829 = vpop.f32.mrb[0].mxu0
    %830 = vdwg.mxu0
    %v831 = vadd.f32 %v758, %v828
    %v832 = vxor.u32 %v831, 2147483648
    %v833 = vmul.f32 %v832, 1.442695
    %v834 = vpow.pop %v833
    %v835 = vadd.f32 %v834, 1.0
    %v836 = vrcp.pop %v835
    %v837 = vmul.f32 1.0, %v836
    %v838 = vadd.f32 %v828, %v298
    %840 = vrot.lane.b32.xlu0 %v838, 64
    %v841 = vpop.permute.xlu0 %840
    %v843 = vmul.f32 %v837, %v841
    %845 = vrot.lane.b32.xlu0 %v843, 64
    %v846 = vpop.permute.xlu0 %845
    %v848 = vadd.f32 %v758, %v846
    %v849 = vtanh.pop %v848
    %v850 = vsub.f32 1.0, %v837
    %852 = vrot.lane.b32.xlu0 %v849, 96
    %v853 = vpop.permute.xlu0 %852
    %v855 = vmul.f32 %v850, %v853
    %v856 = vmul.f32 %v837, %v750
    %v857 = vadd.f32 %v855, %v856
    %859 = vrot.lane.b32.xlu0 %v857, 96
    %v860 = vpop.permute.xlu0 %859
    %s862 = scalar_lea.vmem [#allocation3], 10
    %863 = vst.msk [vmem:[%s862] sm:$0x3] %vm327, %v860
    %s864 = scalar_lea.vmem [#allocation2], 12
    %v865 = vld [vmem:[%s864] sm:$0x3]
    %v866 = vsel %vm81, %v860, 0
    %868 = vmatprep.subr.mxu0 0.0
    %869 = vmatpush1.msra.mxu0 %v64
    %870 = vmatprep.subr.mxu0 0.0
    %871 = vmatpush1.msra.mxu0 %v65
    %872 = vmatprep.subr.mxu0 0.0
    %873 = vmatpush1.msra.mxu0 %v66
    %874 = vmatprep.subr.mxu0 0.0
    %875 = vmatpush1.msra.mxu0 %v67
    %876 = vmatprep.subr.mxu0 0.0
    %877 = vmatpush1.msra.mxu0 0.0
    %878 = vmatprep.subr.mxu0 0.0
    %879 = vmatpush1.msra.mxu0 0.0
    %880 = vmatprep.subr.mxu0 0.0
    %881 = vmatpush1.msra.mxu0 0.0
    %882 = vmatprep.subr.mxu0 0.0
    %883 = vmatpush1.msra.mxu0 0.0
    %884 = vmatprep.subr.mxu0 0.0
    %885 = vmatpush1.msra.mxu0 0.0
    %886 = vmatprep.subr.mxu0 0.0
    %887 = vmatpush1.msra.mxu0 0.0
    %888 = vmatprep.subr.mxu0 0.0
    %889 = vmatpush1.msra.mxu0 0.0
    %890 = vmatprep.subr.mxu0 0.0
    %891 = vmatpush1.msra.mxu0 0.0
    %892 = vmatprep.subr.mxu0 0.0
    %893 = vmatpush1.msra.mxu0 0.0
    %894 = vmatprep.subr.mxu0 0.0
    %895 = vmatpush1.msra.mxu0 0.0
    %896 = vmatprep.subr.mxu0 0.0
    %897 = vmatpush1.msra.mxu0 0.0
    %898 = vmatprep.subr.mxu0 0.0
    %899 = vmatpush1.msra.mxu0 0.0
    %900 = vmatprep.subr.mxu0 0.0
    %901 = vmatpush1.msra.mxu0 0.0
    %902 = vmatprep.subr.mxu0 0.0
    %903 = vmatpush1.msra.mxu0 0.0
    %904 = vmatprep.subr.mxu0 0.0
    %905 = vmatpush1.msra.mxu0 0.0
    %906 = vmatprep.subr.mxu0 0.0
    %907 = vmatpush1.msra.mxu0 0.0
    %908 = vmatprep.subr.mxu0 0.0
    %909 = vmatpush1.msra.mxu0 0.0
    %910 = vmatprep.subr.mxu0 0.0
    %911 = vmatpush1.msra.mxu0 0.0
    %912 = vmatprep.subr.mxu0 0.0
    %913 = vmatpush1.msra.mxu0 0.0
    %914 = vmatprep.subr.mxu0 0.0
    %915 = vmatpush1.msra.mxu0 0.0
    %916 = vmatprep.subr.mxu0 0.0
    %917 = vmatpush1.msra.mxu0 0.0
    %918 = vmatprep.subr.mxu0 0.0
    %919 = vmatpush1.msra.mxu0 0.0
    %920 = vmatprep.subr.mxu0 0.0
    %921 = vmatpush1.msra.mxu0 0.0
    %922 = vmatprep.subr.mxu0 0.0
    %923 = vmatpush1.msra.mxu0 0.0
    %924 = vmatprep.subr.mxu0 0.0
    %925 = vmatpush1.msra.mxu0 0.0
    %926 = vmatprep.subr.mxu0 0.0
    %927 = vmatpush1.msra.mxu0 0.0
    %928 = vmatprep.subr.mxu0 0.0
    %929 = vmatpush1.msra.mxu0 0.0
    %930 = vmatprep.subr.mxu0 0.0
    %931 = vmatpush1.msra.mxu0 0.0
    %932 = vmatprep.mubr.f32.mxu0 0.0
    %933 = vmatmul.mubr.f32.gmra.mrb[0].mxu0 %v866
    %v934 = vpop.f32.mrb[0].mxu0
    %v935 = vadd.f32 0.0, %v934
    %v936 = vpop.f32.mrb[0].mxu0
    %937 = vdwg.mxu0
    %v938 = vadd.f32 %v865, %v935
    %v939 = vxor.u32 %v938, 2147483648
    %v940 = vmul.f32 %v939, 1.442695
    %v941 = vpow.pop %v940
    %v942 = vadd.f32 %v941, 1.0
    %v943 = vrcp.pop %v942
    %v944 = vmul.f32 1.0, %v943
    %v945 = vadd.f32 %v935, %v298
    %947 = vrot.lane.b32.xlu0 %v945, 64
    %v948 = vpop.permute.xlu0 %947
    %v950 = vmul.f32 %v944, %v948
    %952 = vrot.lane.b32.xlu0 %v950, 64
    %v953 = vpop.permute.xlu0 %952
    %v955 = vadd.f32 %v865, %v953
    %v956 = vtanh.pop %v955
    %v957 = vsub.f32 1.0, %v944
    %959 = vrot.lane.b32.xlu0 %v956, 96
    %v960 = vpop.permute.xlu0 %959
    %v962 = vmul.f32 %v957, %v960
    %v963 = vmul.f32 %v944, %v857
    %v964 = vadd.f32 %v962, %v963
    %966 = vrot.lane.b32.xlu0 %v964, 96
    %v967 = vpop.permute.xlu0 %966
    %s969 = scalar_lea.vmem [#allocation3], 12
    %970 = vst.msk [vmem:[%s969] sm:$0x3] %vm327, %v967
    %s971 = scalar_lea.vmem [#allocation2], 14
    %v972 = vld [vmem:[%s971] sm:$0x3]
    %v973 = vsel %vm81, %v967, 0
    %975 = vmatprep.subr.mxu0 0.0
    %976 = vmatpush1.msra.mxu0 %v64
    %977 = vmatprep.subr.mxu0 0.0
    %978 = vmatpush1.msra.mxu0 %v65
    %979 = vmatprep.subr.mxu0 0.0
    %980 = vmatpush1.msra.mxu0 %v66
    %981 = vmatprep.subr.mxu0 0.0
    %982 = vmatpush1.msra.mxu0 %v67
    %983 = vmatprep.subr.mxu0 0.0
    %984 = vmatpush1.msra.mxu0 0.0
    %985 = vmatprep.subr.mxu0 0.0
    %986 = vmatpush1.msra.mxu0 0.0
    %987 = vmatprep.subr.mxu0 0.0
    %988 = vmatpush1.msra.mxu0 0.0
    %989 = vmatprep.subr.mxu0 0.0
    %990 = vmatpush1.msra.mxu0 0.0
    %991 = vmatprep.subr.mxu0 0.0
    %992 = vmatpush1.msra.mxu0 0.0
    %993 = vmatprep.subr.mxu0 0.0
    %994 = vmatpush1.msra.mxu0 0.0
    %995 = vmatprep.subr.mxu0 0.0
    %996 = vmatpush1.msra.mxu0 0.0
    %997 = vmatprep.subr.mxu0 0.0
    %998 = vmatpush1.msra.mxu0 0.0
    %999 = vmatprep.subr.mxu0 0.0
    %1000 = vmatpush1.msra.mxu0 0.0
    %1001 = vmatprep.subr.mxu0 0.0
    %1002 = vmatpush1.msra.mxu0 0.0
    %1003 = vmatprep.subr.mxu0 0.0
    %1004 = vmatpush1.msra.mxu0 0.0
    %1005 = vmatprep.subr.mxu0 0.0
    %1006 = vmatpush1.msra.mxu0 0.0
    %1007 = vmatprep.subr.mxu0 0.0
    %1008 = vmatpush1.msra.mxu0 0.0
    %1009 = vmatprep.subr.mxu0 0.0
    %1010 = vmatpush1.msra.mxu0 0.0
    %1011 = vmatprep.subr.mxu0 0.0
    %1012 = vmatpush1.msra.mxu0 0.0
    %1013 = vmatprep.subr.mxu0 0.0
    %1014 = vmatpush1.msra.mxu0 0.0
    %1015 = vmatprep.subr.mxu0 0.0
    %1016 = vmatpush1.msra.mxu0 0.0
    %1017 = vmatprep.subr.mxu0 0.0
    %1018 = vmatpush1.msra.mxu0 0.0
    %1019 = vmatprep.subr.mxu0 0.0
    %1020 = vmatpush1.msra.mxu0 0.0
    %1021 = vmatprep.subr.mxu0 0.0
    %1022 = vmatpush1.msra.mxu0 0.0
    %1023 = vmatprep.subr.mxu0 0.0
    %1024 = vmatpush1.msra.mxu0 0.0
    %1025 = vmatprep.subr.mxu0 0.0
    %1026 = vmatpush1.msra.mxu0 0.0
    %1027 = vmatprep.subr.mxu0 0.0
    %1028 = vmatpush1.msra.mxu0 0.0
    %1029 = vmatprep.subr.mxu0 0.0
    %1030 = vmatpush1.msra.mxu0 0.0
    %1031 = vmatprep.subr.mxu0 0.0
    %1032 = vmatpush1.msra.mxu0 0.0
    %1033 = vmatprep.subr.mxu0 0.0
    %1034 = vmatpush1.msra.mxu0 0.0
    %1035 = vmatprep.subr.mxu0 0.0
    %1036 = vmatpush1.msra.mxu0 0.0
    %1037 = vmatprep.subr.mxu0 0.0
    %1038 = vmatpush1.msra.mxu0 0.0
    %1039 = vmatprep.mubr.f32.mxu0 0.0
    %1040 = vmatmul.mubr.f32.gmra.mrb[0].mxu0 %v973
    %v1041 = vpop.f32.mrb[0].mxu0
    %v1042 = vadd.f32 0.0, %v1041
    %v1043 = vpop.f32.mrb[0].mxu0
    %1044 = vdwg.mxu0
    %v1045 = vadd.f32 %v972, %v1042
    %v1046 = vxor.u32 %v1045, 2147483648
    %v1047 = vmul.f32 %v1046, 1.442695
    %v1048 = vpow.pop %v1047
    %v1049 = vadd.f32 %v1048, 1.0
    %v1050 = vrcp.pop %v1049
    %v1051 = vmul.f32 1.0, %v1050
    %v1052 = vadd.f32 %v1042, %v298
    %1054 = vrot.lane.b32.xlu0 %v1052, 64
    %v1055 = vpop.permute.xlu0 %1054
    %v1057 = vmul.f32 %v1051, %v1055
    %1059 = vrot.lane.b32.xlu0 %v1057, 64
    %v1060 = vpop.permute.xlu0 %1059
    %v1062 = vadd.f32 %v972, %v1060
    %v1063 = vtanh.pop %v1062
    %v1064 = vsub.f32 1.0, %v1051
    %1066 = vrot.lane.b32.xlu0 %v1063, 96
    %v1067 = vpop.permute.xlu0 %1066
    %v1069 = vmul.f32 %v1064, %v1067
    %v1070 = vmul.f32 %v1051, %v964
    %v1071 = vadd.f32 %v1069, %v1070
    %1073 = vrot.lane.b32.xlu0 %v1071, 96
    %v1074 = vpop.permute.xlu0 %1073
    %s1076 = scalar_lea.vmem [#allocation3], 14
    %1077 = vst.msk [vmem:[%s1076] sm:$0x3] %vm327, %v1074
    %v1078 = vld [vmem:[#allocation3] sm:$0x3]
    %v1079 = vld [vmem:[#allocation3 + $0x2] sm:$0x3]
    %v1080 = vld [vmem:[#allocation3 + $0x4] sm:$0x3]
    %v1081 = vld [vmem:[#allocation3 + $0x6] sm:$0x3]
    %v1082 = vld [vmem:[#allocation3 + $0x8] sm:$0x3]
    %v1083 = vld [vmem:[#allocation3 + $0xa] sm:$0x3]
    %v1084 = vld [vmem:[#allocation3 + $0xc] sm:$0x3]
    %v1085 = vld [vmem:[#allocation3 + $0xe] sm:$0x3]
    %v1086 = vld [vmem:[#allocation6] sm:$0xff]
    %v1087 = vld [vmem:[#allocation6 + $0x8] sm:$0xff]
    %v1088 = vld [vmem:[#allocation6 + $0x10] sm:$0xff]
    %v1089 = vld [vmem:[#allocation6 + $0x18] sm:$0xff]
    %v1090 = vld [vmem:[%s7] sm:$0x1]
    %v1092 = vlaneseq
    %v1093 = vshrl.u32 %v1092, 7
    %v1094 = vsub.s32 0, %v1093
    %v1095 = vrot.slane %v1090, %v1094
    %v1105 = vcombine.low %v1078, %v1079
    %v1106 = vcombine.low %v1080, %v1081
    %v1108 = vunpack.c.l.s4 1983009808
    %v1109 = vunpack.c.0.s8 %v1108
    %v1110 = vlaneseq
    %v1111 = vshrl.u32 %v1110, 7
    %v1112 = vsub.s32 %v1109, %v1111
    %v1113 = vrot.slane %v1105, %v1112
    %v1115 = vunpack.c.l.s4 1983009808
    %v1116 = vunpack.c.0.s8 %v1115
    %v1117 = vlaneseq
    %v1118 = vshrl.u32 %v1117, 7
    %v1119 = vsub.s32 %v1116, %v1118
    %v1120 = vrot.slane %v1106, %v1119
    %v1121 = vcombine.low %v1113, %v1120
    %v1122 = vcombine.low %v1082, %v1083
    %v1123 = vcombine.low %v1084, %v1085
    %v1125 = vunpack.c.l.s4 1983009808
    %v1126 = vunpack.c.0.s8 %v1125
    %v1127 = vlaneseq
    %v1128 = vshrl.u32 %v1127, 7
    %v1129 = vsub.s32 %v1126, %v1128
    %v1130 = vrot.slane %v1122, %v1129
    %v1132 = vunpack.c.l.s4 1983009808
    %v1133 = vunpack.c.0.s8 %v1132
    %v1134 = vlaneseq
    %v1135 = vshrl.u32 %v1134, 7
    %v1136 = vsub.s32 %v1133, %v1135
    %v1137 = vrot.slane %v1123, %v1136
    %v1138 = vcombine.low %v1130, %v1137
    %v1139 = vsel %vm81, %v1121, 0
    %v1141 = vsel %vm81, %v1138, 0
    %1143 = vmatprep.subr.mxu0 0.0
    %1144 = vmatpush1.msra.mxu0 %v1086
    %1145 = vmatprep.subr.mxu0 0.0
    %1146 = vmatpush1.msra.mxu0 %v1087
    %1147 = vmatprep.subr.mxu0 0.0
    %1148 = vmatpush1.msra.mxu0 %v1088
    %1149 = vmatprep.subr.mxu0 0.0
    %1150 = vmatpush1.msra.mxu0 %v1089
    %1151 = vmatprep.subr.mxu0 0.0
    %1152 = vmatpush1.msra.mxu0 0.0
    %1153 = vmatprep.subr.mxu0 0.0
    %1154 = vmatpush1.msra.mxu0 0.0
    %1155 = vmatprep.subr.mxu0 0.0
    %1156 = vmatpush1.msra.mxu0 0.0
    %1157 = vmatprep.subr.mxu0 0.0
    %1158 = vmatpush1.msra.mxu0 0.0
    %1159 = vmatprep.subr.mxu0 0.0
    %1160 = vmatpush1.msra.mxu0 0.0
    %1161 = vmatprep.subr.mxu0 0.0
    %1162 = vmatpush1.msra.mxu0 0.0
    %1163 = vmatprep.subr.mxu0 0.0
    %1164 = vmatpush1.msra.mxu0 0.0
    %1165 = vmatprep.subr.mxu0 0.0
    %1166 = vmatpush1.msra.mxu0 0.0
    %1167 = vmatprep.subr.mxu0 0.0
    %1168 = vmatpush1.msra.mxu0 0.0
    %1169 = vmatprep.subr.mxu0 0.0
    %1170 = vmatpush1.msra.mxu0 0.0
    %1171 = vmatprep.subr.mxu0 0.0
    %1172 = vmatpush1.msra.mxu0 0.0
    %1173 = vmatprep.subr.mxu0 0.0
    %1174 = vmatpush1.msra.mxu0 0.0
    %1175 = vmatprep.subr.mxu0 0.0
    %1176 = vmatpush1.msra.mxu0 0.0
    %1177 = vmatprep.subr.mxu0 0.0
    %1178 = vmatpush1.msra.mxu0 0.0
    %1179 = vmatprep.subr.mxu0 0.0
    %1180 = vmatpush1.msra.mxu0 0.0
    %1181 = vmatprep.subr.mxu0 0.0
    %1182 = vmatpush1.msra.mxu0 0.0
    %1183 = vmatprep.subr.mxu0 0.0
    %1184 = vmatpush1.msra.mxu0 0.0
    %1185 = vmatprep.subr.mxu0 0.0
    %1186 = vmatpush1.msra.mxu0 0.0
    %1187 = vmatprep.subr.mxu0 0.0
    %1188 = vmatpush1.msra.mxu0 0.0
    %1189 = vmatprep.subr.mxu0 0.0
    %1190 = vmatpush1.msra.mxu0 0.0
    %1191 = vmatprep.subr.mxu0 0.0
    %1192 = vmatpush1.msra.mxu0 0.0
    %1193 = vmatprep.subr.mxu0 0.0
    %1194 = vmatpush1.msra.mxu0 0.0
    %1195 = vmatprep.subr.mxu0 0.0
    %1196 = vmatpush1.msra.mxu0 0.0
    %1197 = vmatprep.subr.mxu0 0.0
    %1198 = vmatpush1.msra.mxu0 0.0
    %1199 = vmatprep.subr.mxu0 0.0
    %1200 = vmatpush1.msra.mxu0 0.0
    %1201 = vmatprep.subr.mxu0 0.0
    %1202 = vmatpush1.msra.mxu0 0.0
    %1203 = vmatprep.subr.mxu0 0.0
    %1204 = vmatpush1.msra.mxu0 0.0
    %1205 = vmatprep.subr.mxu0 0.0
    %1206 = vmatpush1.msra.mxu0 0.0
    %1207 = vmatprep.mubr.f32.mxu0 0.0
    %1208 = vmatmul.mubr.f32.gmra.mrb[0].mxu0 %v1139
    %v1209 = vpop.f32.mrb[0].mxu0
    %v1210 = vadd.f32 %v1095, %v1209
    %v1211 = vpop.f32.mrb[0].mxu0
    %1212 = vmatprep.mubr.f32.mxu0 0.0
    %1213 = vmatmul.mubr.f32.gmra.mrb[0].mxu0 %v1141
    %v1214 = vpop.f32.mrb[0].mxu0
    %v1215 = vadd.f32 %v1095, %v1214
    %v1216 = vpop.f32.mrb[0].mxu0
    %1217 = vdwg.mxu0
    %1218 = vst.msk [vmem:[%s8] sm:$0xff] %vm81, %v1210
    %1219 = vst.msk [vmem:[%s8 + $0x8] sm:$0xff] %vm81, %v1215
    // Predicated region
    $region42: #{decoder_forward.1} parent=1 // pred_check
      _
    $region43: #{decoder_forward.1} parent=1 // pred_check_branch
      %1221 = sbr.rel (0) target = $region45
    $region44: #{decoder_forward.1} parent=1 // pred_region
      _
    $region45: #{decoder_forward.1} parent=1 // pred_fallthru
      _
    // Predicated region
    $region46: #{decoder_forward.1} parent=1 // pred_check
      _
    $region47: #{decoder_forward.1} parent=1 // pred_check_branch
      %1223 = sbr.rel (0) target = $region49
    $region48: #{decoder_forward.1} parent=1 // pred_region
      _
    $region49: #{decoder_forward.1} parent=1 // pred_fallthru
      _
    %1224 = vsyncpa [#allocation5], 1
    %1225 = vsyncpa [#allocation7], 1

</llo_original>
